<compile_context>
chip_gen: v7x
topology: tpu7x:2x2x1
jax: 0.10.0
libtpu: 0.0.40
codegen_flags: <defaults>
</compile_context>

<pallas_src>
import functools

import jax
import jax.numpy as jnp
from jax.experimental import pallas as pl
from jax.experimental.pallas import tpu as pltpu

NEG_INF = -1e9


def _round_up(x, m):
    return (x + m - 1) // m * m


def _block_diag_att(att):
    """(H, D) per-head attention vectors -> (H, H*D) block-diagonal matrix."""
    H, D = att.shape
    eye = jnp.eye(H, dtype=att.dtype)
    return (eye[:, :, None] * att[:, None, :]).reshape(H, H * D)


# ---------------------------------------------------------------------------
# Fused kernel: grid = (n_modalities,)
# ---------------------------------------------------------------------------
def mvgat_fused_kernel(x0_ref, wsrc_ref, wdst_ref, asrc_ref, adst_ref,
                       bias_ref, adj_ref, coeff_ref, wemb_ref, bemb_ref,
                       dot_ref, emb_ref, xstore_ref,
                       *, n_heads, head_dim, alpha):
    m_idx = pl.program_id(0)

    @pl.when(m_idx == 0)
    def _():
        xstore_ref[...] = jnp.zeros_like(xstore_ref)

    x0 = x0_ref[...]          # (N, F)  pre-GAT node features (f32)
    w_src = wsrc_ref[...]     # (F, F)  source-side projection (messages)
    w_dst = wdst_ref[...]     # (F, F)  destination-side projection (attention)
    adj = adj_ref[...]        # (N, N)  edge weights (0 = no edge); adj[i, j]: j -> i
    a_src_m = asrc_ref[...]   # (H, F)  block-diagonal att_src
    a_dst_m = adst_ref[...]   # (H, F)  block-diagonal att_dst
    bias = bias_ref[...]      # (1, F)
    coeff = coeff_ref[...]    # (N, 1)  net_scale[m] * interp_mask[:, m]

    N, F = x0.shape
    contract_last = (((1,), (1,)), ((), ()))

    # Linear projections on the MXU (bf16 inputs, f32 accumulation).
    x0_bf = x0.astype(jnp.bfloat16)
    xp_src = jnp.dot(x0_bf, w_src.astype(jnp.bfloat16),
                     preferred_element_type=jnp.float32)             # (N, F)
    xp_dst = jnp.dot(x0_bf, w_dst.astype(jnp.bfloat16),
                     preferred_element_type=jnp.float32)             # (N, F)

    # Batched attention coefficients: two matmuls instead of 2*H row dots.
    a_src_all = jax.lax.dot_general(a_src_m, xp_src, contract_last,
                                    preferred_element_type=jnp.float32)  # (H, N)
    a_dst_all = jax.lax.dot_general(xp_dst, a_dst_m, contract_last,
                                    preferred_element_type=jnp.float32)  # (N, H)

    no_edge = adj <= 0.0
    xp_bf = xp_src.astype(jnp.bfloat16)
    col_ids = jax.lax.broadcasted_iota(jnp.int32, (1, F), 1)

    acc = jnp.zeros((N, F), jnp.float32)
    for h in range(n_heads):                                   # static unroll
        lo = h * head_dim
        # logits[i, j]: destination i attends over source j.
        logits = a_dst_all[:, h:h + 1] + a_src_all[h:h + 1, :]       # (N, N)
        logits = jnp.where(logits >= 0.0, logits, alpha * logits)    # LeakyReLU
        logits = jnp.where(no_edge, NEG_INF, logits)
        row_max = jnp.max(logits, axis=-1, keepdims=True)
        p = jnp.exp(logits - row_max)
        inv_denom = pl.reciprocal(jnp.sum(p, axis=-1, keepdims=True),
                                  approx=True)                       # EUP slot
        # WeightedGATConv: edge weight scales the post-softmax attention;
        # folded into the numerator before the aggregation matmul.
        pw = (p * adj).astype(jnp.bfloat16)                          # (N, N)
        # Head-masked full-width RHS: aggregation output is directly (N, F),
        # so head outputs accumulate full width (no 16-lane partial slices).
        head_cols = jnp.logical_and(col_ids >= lo, col_ids < lo + head_dim)
        xp_h = jnp.where(head_cols, xp_bf, jnp.zeros_like(xp_bf))    # (N, F)
        agg = jnp.dot(pw, xp_h, preferred_element_type=jnp.float32)  # (N, F)
        acc = acc + inv_denom * agg                  # (N,1) scale on (N,F): cheap

    x_mod = acc + bias                                               # (N, F)
    xstore_ref[...] += coeff * x_mod

    @pl.when(m_idx == pl.num_programs(0) - 1)
    def _():
        emb = jnp.dot(xstore_ref[...], wemb_ref[...],
                      preferred_element_type=jnp.float32) + bemb_ref[...]
        emb_ref[...] = emb
        dot_ref[...] = jax.lax.dot_general(
            emb, emb, contract_last, preferred_element_type=jnp.float32)


# ---------------------------------------------------------------------------
# pallas_call wrapper
# ---------------------------------------------------------------------------
def run_mvgat_fused(x0, gat_w_src, gat_w_dst, a_src, a_dst, gat_b, adj, coeff,
                    w_emb, b_emb, *, n_heads, head_dim, alpha):
    M, N, F = x0.shape
    E = w_emb.shape[1]
    kernel = functools.partial(mvgat_fused_kernel, n_heads=n_heads,
                               head_dim=head_dim, alpha=alpha)

    def per_mod(block_shape):        # blocked along modality axis (squeezed)
        return pl.BlockSpec(block_shape, lambda m: (m, 0, 0))

    def shared(block_shape):         # same block for every modality
        return pl.BlockSpec(block_shape, lambda m: (0, 0))

    grid_spec = pltpu.PrefetchScalarGridSpec(
        num_scalar_prefetch=0,
        grid=(M,),
        in_specs=[
            per_mod((None, N, F)),          # x0
            per_mod((None, F, F)),          # gat src projection
            per_mod((None, F, F)),          # gat dst projection
            per_mod((None, n_heads, F)),    # att_src (block-diagonal)
            per_mod((None, n_heads, F)),    # att_dst (block-diagonal)
            per_mod((None, 1, F)),          # gat bias
            per_mod((None, N, N)),          # adjacency
            per_mod((None, N, 1)),          # coeff
            shared((F, E)),                 # emb weight
            shared((1, E)),                 # emb bias
        ],
        out_specs=(
            shared((N, N)),                 # dot
            shared((N, E)),                 # emb
        ),
        scratch_shapes=[pltpu.VMEM((N, F), jnp.float32)],   # x_store accumulator
    )
    return pl.pallas_call(
        kernel,
        out_shape=(jax.ShapeDtypeStruct((N, N), jnp.float32),
                   jax.ShapeDtypeStruct((N, E), jnp.float32)),
        grid_spec=grid_spec,
        compiler_params=pltpu.CompilerParams(
            # Modality axis carries the x_store accumulator -> reduction axis.
            dimension_semantics=("arbitrary",),
            vmem_limit_bytes=32 * 1024 * 1024),
    )(x0, gat_w_src, gat_w_dst, a_src, a_dst, gat_b, adj, coeff, w_emb, b_emb)


# ---------------------------------------------------------------------------
# Parameters + forward glue
# ---------------------------------------------------------------------------
def init_params(key, *, in_size, dimension, n_heads, emb_size, n_modalities):
    F = dimension * n_heads
    params = {"encoders": []}
    keys = jax.random.split(key, 6 * n_modalities + 2)
    k = 0
    for _ in range(n_modalities):
        enc = {
            "pre_w": jax.random.normal(keys[k + 0], (in_size, F)) * 0.1,
            "pre_b": jax.random.normal(keys[k + 1], (1, F)) * 0.1,
            "gat_w_src": jax.random.normal(keys[k + 2], (F, F)) * 0.1,
            "gat_w_dst": jax.random.normal(keys[k + 3], (F, F)) * 0.1,
            "att_src": jax.random.normal(keys[k + 4], (n_heads, dimension)) * 0.1,
            "att_dst": jax.random.normal(keys[k + 5], (n_heads, dimension)) * 0.1,
            "gat_b": jnp.zeros((1, F), jnp.float32),
        }
        params["encoders"].append({n: v.astype(jnp.float32) for n, v in enc.items()})
        k += 6
    params["emb_w"] = (jax.random.normal(keys[k], (F, emb_size)) * 0.1
                       ).astype(jnp.float32)
    params["emb_b"] = (jax.random.normal(keys[k + 1], (1, emb_size)) * 0.1
                       ).astype(jnp.float32)
    params["interp_scales"] = jnp.full((1, n_modalities), 1.0 / n_modalities,
                                       jnp.float32)
    return params


def multiview_gat_forward(params, adjs, masks, *, dimension, n_heads, alpha=0.1):
    """adjs: (M, N, N) dense weighted adjacencies; masks: (N, M) 0/1 floats."""
    M, N, _ = adjs.shape

    # Interp (evaluate / deterministic mode).
    net_scales = jax.nn.softmax(params["interp_scales"], axis=-1)            # (1, M)
    interp_masks = jax.nn.softmax(masks + (1.0 - masks) * -1e10, axis=-1)    # (N, M)
    coeff = (net_scales * interp_masks).astype(jnp.float32)                  # (N, M)
    coeff = jnp.transpose(coeff)[:, :, None]                                 # (M, N, 1)

    encs = params["encoders"]
    # GATEncoder input: x0 = pre_gat.weight.T[n_id] + pre_gat.bias (n_id = arange(N)).
    x0 = jnp.stack([e["pre_w"] + e["pre_b"] for e in encs])                  # (M, N, F)
    gat_w_src = jnp.stack([e["gat_w_src"] for e in encs])                    # (M, F, F)
    gat_w_dst = jnp.stack([e["gat_w_dst"] for e in encs])                    # (M, F, F)
    gat_b = jnp.stack([e["gat_b"] for e in encs])                            # (M, 1, F)
    a_src = jnp.stack([_block_diag_att(e["att_src"]) for e in encs])         # (M, H, F)
    a_dst = jnp.stack([_block_diag_att(e["att_dst"]) for e in encs])         # (M, H, F)

    # Pad the node dim to a multiple of 128 for lane-dense attention tiles.
    # Padded nodes have no edges and zero coeff -> no contribution; sliced off.
    N_pad = _round_up(N, 128)
    pad = N_pad - N
    if pad:
        x0 = jnp.pad(x0, ((0, 0), (0, pad), (0, 0)))
        adjs = jnp.pad(adjs, ((0, 0), (0, pad), (0, pad)))
        coeff = jnp.pad(coeff, ((0, 0), (0, pad), (0, 0)))

    dot_p, emb_p = run_mvgat_fused(
        x0, gat_w_src, gat_w_dst, a_src, a_dst, gat_b, adjs, coeff,
        params["emb_w"], params["emb_b"],
        n_heads=n_heads, head_dim=dimension, alpha=alpha)
    return dot_p[:N, :N], emb_p[:N, :], net_scales


# ---------------------------------------------------------------------------
# Demo
# ---------------------------------------------------------------------------
if __name__ == "__main__":
    in_size = 32          # number of nodes == batch size (full-batch flow)
    dimension = 16
    n_heads = 2
    emb_size = 16
    n_modalities = 2
    N = in_size

    key = jax.random.PRNGKey(0)
    k_param, k_adj, k_mask = jax.random.split(key, 3)

    params = init_params(k_param, in_size=in_size, dimension=dimension,
                         n_heads=n_heads, emb_size=emb_size,
                         n_modalities=n_modalities)

    # Dense weighted adjacencies with self loops (weight 1.0).
    adj_keys = jax.random.split(k_adj, n_modalities)
    adjs = []
    for ak in adj_keys:
        w = jax.random.uniform(ak, (N, N), jnp.float32)
        a = jnp.where(w > 0.7, w, 0.0)
        a = jnp.maximum(a, a.T)                      # symmetrize
        a = a * (1.0 - jnp.eye(N)) + jnp.eye(N)      # self loops, weight 1.0
        adjs.append(a)
    adjs = jnp.stack(adjs, axis=0).astype(jnp.float32)

    # Node-in-network masks (N, M).
    masks = (jax.random.uniform(k_mask, (N, n_modalities)) > 0.4
             ).astype(jnp.float32)
    masks = masks.at[:, 0].set(1.0)                  # every node in >=1 network

    dot, emb, net_scales = multiview_gat_forward(
        params, adjs, masks, dimension=dimension, n_heads=n_heads, alpha=0.1)

    jax.block_until_ready((dot, emb, net_scales))
    assert dot.shape == (N, N)
    assert emb.shape == (N, emb_size)
    assert net_scales.shape == (1, n_modalities)
    assert bool(jnp.isfinite(dot).all()) and bool(jnp.isfinite(emb).all())
    print("KERNEL_OK")
</pallas_src>

<mosaic_0001>
module attributes {stable_mosaic.version = 11 : i64} {
  func.func @mvgat_fused_kernel(%arg0: i32, %arg1: memref<1x128x32xf32, #tpu.memory_space<vmem>>, %arg2: memref<1x32x32xf32, #tpu.memory_space<vmem>>, %arg3: memref<1x32x32xf32, #tpu.memory_space<vmem>>, %arg4: memref<1x2x32xf32, #tpu.memory_space<vmem>>, %arg5: memref<1x2x32xf32, #tpu.memory_space<vmem>>, %arg6: memref<1x1x32xf32, #tpu.memory_space<vmem>>, %arg7: memref<1x128x128xf32, #tpu.memory_space<vmem>>, %arg8: memref<1x128x1xf32, #tpu.memory_space<vmem>>, %arg9: memref<32x16xf32, #tpu.memory_space<vmem>>, %arg10: memref<1x16xf32, #tpu.memory_space<vmem>>, %arg11: memref<128x128xf32, #tpu.memory_space<vmem>>, %arg12: memref<128x16xf32, #tpu.memory_space<vmem>>, %arg13: memref<128x32xf32, #tpu.memory_space<vmem>>) attributes {dimension_semantics = [#tpu.dimension_semantics<arbitrary>], iteration_bounds = array<i64: 2>, scalar_prefetch = 0 : i64, scratch_operands = 1 : i64, tpu.core_type = #tpu.core_type<tc>, window_params = [{transform_indices = @transform_0, window_bounds = array<i64: 1, 128, 32>}, {transform_indices = @transform_1, window_bounds = array<i64: 1, 32, 32>}, {transform_indices = @transform_2, window_bounds = array<i64: 1, 32, 32>}, {transform_indices = @transform_3, window_bounds = array<i64: 1, 2, 32>}, {transform_indices = @transform_4, window_bounds = array<i64: 1, 2, 32>}, {transform_indices = @transform_5, window_bounds = array<i64: 1, 1, 32>}, {transform_indices = @transform_6, window_bounds = array<i64: 1, 128, 128>}, {transform_indices = @transform_7, window_bounds = array<i64: 1, 128, 1>}, {pipeline_mode = #tpu.pipeline_mode<synchronous>, transform_indices = @transform_8, window_bounds = array<i64: 32, 16>}, {pipeline_mode = #tpu.pipeline_mode<synchronous>, transform_indices = @transform_9, window_bounds = array<i64: 1, 16>}, {pipeline_mode = #tpu.pipeline_mode<synchronous>, transform_indices = @transform_10, window_bounds = array<i64: 128, 128>}, {pipeline_mode = #tpu.pipeline_mode<synchronous>, transform_indices = @transform_11, window_bounds = array<i64: 128, 16>}]} {
    %c0_i32 = arith.constant 0 : i32
    %0 = arith.cmpi eq, %arg0, %c0_i32 : i32
    %1 = arith.extui %0 : i1 to i32
    %c0_i32_0 = arith.constant 0 : i32
    %2 = arith.cmpi ne, %1, %c0_i32_0 : i32
    scf.if %2 {
      %cst_50 = arith.constant 0.000000e+00 : f32
      %111 = vector.broadcast %cst_50 : f32 to vector<128x32xf32>
      %c0_51 = arith.constant 0 : index
      %c0_52 = arith.constant 0 : index
      %112 = vector.load %arg13[%c0_51, %c0_52] : memref<128x32xf32, #tpu.memory_space<vmem>>, vector<128x32xf32>
      tpu.vector_store %arg13[%c0_51, %c0_52], %111 {strides = array<i32>} : memref<128x32xf32, #tpu.memory_space<vmem>>, vector<128x32xf32>,
    } else {
    }
    %c0 = arith.constant 0 : index
    %c0_1 = arith.constant 0 : index
    %c0_2 = arith.constant 0 : index
    %3 = vector.load %arg1[%c0, %c0_1, %c0_2] : memref<1x128x32xf32, #tpu.memory_space<vmem>>, vector<1x128x32xf32>
    %4 = vector.shape_cast %3 : vector<1x128x32xf32> to vector<128x32xf32>
    %c0_3 = arith.constant 0 : index
    %c0_4 = arith.constant 0 : index
    %c0_5 = arith.constant 0 : index
    %5 = vector.load %arg2[%c0_3, %c0_4, %c0_5] : memref<1x32x32xf32, #tpu.memory_space<vmem>>, vector<1x32x32xf32>
    %6 = vector.shape_cast %5 : vector<1x32x32xf32> to vector<32x32xf32>
    %c0_6 = arith.constant 0 : index
    %c0_7 = arith.constant 0 : index
    %c0_8 = arith.constant 0 : index
    %7 = vector.load %arg3[%c0_6, %c0_7, %c0_8] : memref<1x32x32xf32, #tpu.memory_space<vmem>>, vector<1x32x32xf32>
    %8 = vector.shape_cast %7 : vector<1x32x32xf32> to vector<32x32xf32>
    %c0_9 = arith.constant 0 : index
    %c0_10 = arith.constant 0 : index
    %c0_11 = arith.constant 0 : index
    %9 = vector.load %arg7[%c0_9, %c0_10, %c0_11] : memref<1x128x128xf32, #tpu.memory_space<vmem>>, vector<1x128x128xf32>
    %10 = vector.shape_cast %9 : vector<1x128x128xf32> to vector<128x128xf32>
    %c0_12 = arith.constant 0 : index
    %c0_13 = arith.constant 0 : index
    %c0_14 = arith.constant 0 : index
    %11 = vector.load %arg4[%c0_12, %c0_13, %c0_14] : memref<1x2x32xf32, #tpu.memory_space<vmem>>, vector<1x2x32xf32>
    %12 = vector.shape_cast %11 : vector<1x2x32xf32> to vector<2x32xf32>
    %c0_15 = arith.constant 0 : index
    %c0_16 = arith.constant 0 : index
    %c0_17 = arith.constant 0 : index
    %13 = vector.load %arg5[%c0_15, %c0_16, %c0_17] : memref<1x2x32xf32, #tpu.memory_space<vmem>>, vector<1x2x32xf32>
    %14 = vector.shape_cast %13 : vector<1x2x32xf32> to vector<2x32xf32>
    %c0_18 = arith.constant 0 : index
    %c0_19 = arith.constant 0 : index
    %c0_20 = arith.constant 0 : index
    %15 = vector.load %arg6[%c0_18, %c0_19, %c0_20] : memref<1x1x32xf32, #tpu.memory_space<vmem>>, vector<1x1x32xf32>
    %16 = vector.shape_cast %15 : vector<1x1x32xf32> to vector<1x32xf32>
    %c0_21 = arith.constant 0 : index
    %c0_22 = arith.constant 0 : index
    %c0_23 = arith.constant 0 : index
    %17 = vector.load %arg8[%c0_21, %c0_22, %c0_23] : memref<1x128x1xf32, #tpu.memory_space<vmem>>, vector<1x128x1xf32>
    %18 = vector.shape_cast %17 : vector<1x128x1xf32> to vector<128x1xf32>
    %19 = arith.truncf %4 : vector<128x32xf32> to vector<128x32xbf16>
    %20 = arith.truncf %6 : vector<32x32xf32> to vector<32x32xbf16>
    %cst = arith.constant dense<0.000000e+00> : vector<128x32xf32>
    %21 = tpu.matmul %19, %20, %cst {dimension_numbers = #tpu.dot_dimension_numbers<[1], [0], [0], [1], [0, 0, 1, 1], [], []>} : vector<128x32xbf16>, vector<32x32xbf16>, vector<128x32xf32> -> vector<128x32xf32>
    %22 = arith.truncf %8 : vector<32x32xf32> to vector<32x32xbf16>
    %cst_24 = arith.constant dense<0.000000e+00> : vector<128x32xf32>
    %23 = tpu.matmul %19, %22, %cst_24 {dimension_numbers = #tpu.dot_dimension_numbers<[1], [0], [0], [1], [0, 0, 1, 1], [], []>} : vector<128x32xbf16>, vector<32x32xbf16>, vector<128x32xf32> -> vector<128x32xf32>
    %cst_25 = arith.constant dense<0.000000e+00> : vector<2x128xf32>
    %24 = tpu.matmul %12, %21, %cst_25 {dimension_numbers = #tpu.dot_dimension_numbers<[1], [1], [0], [0], [0, 0, 1, 0], [], []>} : vector<2x32xf32>, vector<128x32xf32>, vector<2x128xf32> -> vector<2x128xf32>
    %cst_26 = arith.constant dense<0.000000e+00> : vector<128x2xf32>
    %25 = tpu.matmul %23, %14, %cst_26 {dimension_numbers = #tpu.dot_dimension_numbers<[1], [1], [0], [0], [0, 0, 1, 0], [], []>} : vector<128x32xf32>, vector<2x32xf32>, vector<128x2xf32> -> vector<128x2xf32>
    %cst_27 = arith.constant 0.000000e+00 : f32
    %26 = vector.broadcast %cst_27 : f32 to vector<128x128xf32>
    %27 = arith.cmpf ole, %10, %26 : vector<128x128xf32>
    %28 = arith.truncf %21 : vector<128x32xf32> to vector<128x32xbf16>
    %29 = tpu.iota {dimensions = array<i32: 1>} : vector<1x32xi32>
    %cst_28 = arith.constant 0.000000e+00 : f32
    %30 = vector.broadcast %cst_28 : f32 to vector<128x32xf32>
    %31 = vector.extract_strided_slice %25 {offsets = [0, 0], sizes = [128, 1], strides = [1, 1]} : vector<128x2xf32> to vector<128x1xf32>
    %32 = vector.extract_strided_slice %24 {offsets = [0, 0], sizes = [1, 128], strides = [1, 1]} : vector<2x128xf32> to vector<1x128xf32>
    %33 = vector.broadcast %31 : vector<128x1xf32> to vector<128x128xf32>
    %34 = vector.broadcast %32 : vector<1x128xf32> to vector<128x128xf32>
    %35 = arith.addf %33, %34 : vector<128x128xf32>
    %cst_29 = arith.constant 0.000000e+00 : f32
    %36 = vector.broadcast %cst_29 : f32 to vector<128x128xf32>
    %37 = arith.cmpf oge, %35, %36 : vector<128x128xf32>
    %cst_30 = arith.constant 1.000000e-01 : f32
    %38 = vector.broadcast %cst_30 : f32 to vector<128x128xf32>
    %39 = arith.mulf %38, %35 : vector<128x128xf32>
    %40 = arith.select %37, %35, %39 : vector<128x128xi1>, vector<128x128xf32>
    %cst_31 = arith.constant -1.000000e+09 : f32
    %41 = vector.broadcast %cst_31 : f32 to vector<128x128xf32>
    %42 = arith.select %27, %41, %40 : vector<128x128xi1>, vector<128x128xf32>
    %cst_32 = arith.constant dense<0xFF800000> : vector<128xf32>
    %43 = vector.multi_reduction <maximumf>, %42, %cst_32 [1] : vector<128x128xf32> to vector<128xf32>
    %44 = vector.shape_cast %43 : vector<128xf32> to vector<128x1xf32>
    %45 = vector.broadcast %44 : vector<128x1xf32> to vector<128x128xf32>
    %46 = arith.subf %42, %45 : vector<128x128xf32>
    %47 = math.exp %46 : vector<128x128xf32>
    %cst_33 = arith.constant dense<0.000000e+00> : vector<128xf32>
    %48 = vector.multi_reduction <add>, %47, %cst_33 [1] : vector<128x128xf32> to vector<128xf32>
    %49 = vector.shape_cast %48 : vector<128xf32> to vector<128x1xf32>
    %50 = tpu.reciprocal %49 {approx = true} : vector<128x1xf32> -> vector<128x1xf32>
    %51 = arith.mulf %47, %10 : vector<128x128xf32>
    %52 = arith.truncf %51 : vector<128x128xf32> to vector<128x128xbf16>
    %c0_i32_34 = arith.constant 0 : i32
    %53 = vector.broadcast %c0_i32_34 : i32 to vector<1x32xi32>
    %54 = arith.cmpi sge, %29, %53 : vector<1x32xi32>
    %c16_i32 = arith.constant 16 : i32
    %55 = vector.broadcast %c16_i32 : i32 to vector<1x32xi32>
    %56 = arith.cmpi slt, %29, %55 : vector<1x32xi32>
    %57 = arith.andi %54, %56 : vector<1x32xi1>
    %cst_35 = arith.constant 0.000000e+00 : bf16
    %58 = vector.broadcast %cst_35 : bf16 to vector<128x32xbf16>
    %59 = vector.shape_cast %57 : vector<1x32xi1> to vector<1x32xi1>
    %60 = vector.broadcast %59 : vector<1x32xi1> to vector<128x32xi1>
    %61 = arith.select %60, %28, %58 : vector<128x32xi1>, vector<128x32xbf16>
    %cst_36 = arith.constant dense<0.000000e+00> : vector<128x32xf32>
    %62 = tpu.matmul %52, %61, %cst_36 {dimension_numbers = #tpu.dot_dimension_numbers<[1], [0], [0], [1], [0, 0, 1, 1], [], []>} : vector<128x128xbf16>, vector<128x32xbf16>, vector<128x32xf32> -> vector<128x32xf32>
    %63 = vector.broadcast %50 : vector<128x1xf32> to vector<128x32xf32>
    %64 = arith.mulf %63, %62 : vector<128x32xf32>
    %65 = arith.addf %30, %64 : vector<128x32xf32>
    %66 = vector.extract_strided_slice %25 {offsets = [0, 1], sizes = [128, 1], strides = [1, 1]} : vector<128x2xf32> to vector<128x1xf32>
    %67 = vector.extract_strided_slice %24 {offsets = [1, 0], sizes = [1, 128], strides = [1, 1]} : vector<2x128xf32> to vector<1x128xf32>
    %68 = vector.broadcast %66 : vector<128x1xf32> to vector<128x128xf32>
    %69 = vector.broadcast %67 : vector<1x128xf32> to vector<128x128xf32>
    %70 = arith.addf %68, %69 : vector<128x128xf32>
    %cst_37 = arith.constant 0.000000e+00 : f32
    %71 = vector.broadcast %cst_37 : f32 to vector<128x128xf32>
    %72 = arith.cmpf oge, %70, %71 : vector<128x128xf32>
    %cst_38 = arith.constant 1.000000e-01 : f32
    %73 = vector.broadcast %cst_38 : f32 to vector<128x128xf32>
    %74 = arith.mulf %73, %70 : vector<128x128xf32>
    %75 = arith.select %72, %70, %74 : vector<128x128xi1>, vector<128x128xf32>
    %cst_39 = arith.constant -1.000000e+09 : f32
    %76 = vector.broadcast %cst_39 : f32 to vector<128x128xf32>
    %77 = arith.select %27, %76, %75 : vector<128x128xi1>, vector<128x128xf32>
    %cst_40 = arith.constant dense<0xFF800000> : vector<128xf32>
    %78 = vector.multi_reduction <maximumf>, %77, %cst_40 [1] : vector<128x128xf32> to vector<128xf32>
    %79 = vector.shape_cast %78 : vector<128xf32> to vector<128x1xf32>
    %80 = vector.broadcast %79 : vector<128x1xf32> to vector<128x128xf32>
    %81 = arith.subf %77, %80 : vector<128x128xf32>
    %82 = math.exp %81 : vector<128x128xf32>
    %cst_41 = arith.constant dense<0.000000e+00> : vector<128xf32>
    %83 = vector.multi_reduction <add>, %82, %cst_41 [1] : vector<128x128xf32> to vector<128xf32>
    %84 = vector.shape_cast %83 : vector<128xf32> to vector<128x1xf32>
    %85 = tpu.reciprocal %84 {approx = true} : vector<128x1xf32> -> vector<128x1xf32>
    %86 = arith.mulf %82, %10 : vector<128x128xf32>
    %87 = arith.truncf %86 : vector<128x128xf32> to vector<128x128xbf16>
    %c16_i32_42 = arith.constant 16 : i32
    %88 = vector.broadcast %c16_i32_42 : i32 to vector<1x32xi32>
    %89 = arith.cmpi sge, %29, %88 : vector<1x32xi32>
    %c32_i32 = arith.constant 32 : i32
    %90 = vector.broadcast %c32_i32 : i32 to vector<1x32xi32>
    %91 = arith.cmpi slt, %29, %90 : vector<1x32xi32>
    %92 = arith.andi %89, %91 : vector<1x32xi1>
    %cst_43 = arith.constant 0.000000e+00 : bf16
    %93 = vector.broadcast %cst_43 : bf16 to vector<128x32xbf16>
    %94 = vector.shape_cast %92 : vector<1x32xi1> to vector<1x32xi1>
    %95 = vector.broadcast %94 : vector<1x32xi1> to vector<128x32xi1>
    %96 = arith.select %95, %28, %93 : vector<128x32xi1>, vector<128x32xbf16>
    %cst_44 = arith.constant dense<0.000000e+00> : vector<128x32xf32>
    %97 = tpu.matmul %87, %96, %cst_44 {dimension_numbers = #tpu.dot_dimension_numbers<[1], [0], [0], [1], [0, 0, 1, 1], [], []>} : vector<128x128xbf16>, vector<128x32xbf16>, vector<128x32xf32> -> vector<128x32xf32>
    %98 = vector.broadcast %85 : vector<128x1xf32> to vector<128x32xf32>
    %99 = arith.mulf %98, %97 : vector<128x32xf32>
    %100 = arith.addf %65, %99 : vector<128x32xf32>
    %101 = vector.broadcast %16 : vector<1x32xf32> to vector<128x32xf32>
    %102 = arith.addf %100, %101 : vector<128x32xf32>
    %c0_45 = arith.constant 0 : index
    %c0_46 = arith.constant 0 : index
    %103 = vector.load %arg13[%c0_45, %c0_46] : memref<128x32xf32, #tpu.memory_space<vmem>>, vector<128x32xf32>
    %104 = vector.broadcast %18 : vector<128x1xf32> to vector<128x32xf32>
    %105 = arith.mulf %104, %102 : vector<128x32xf32>
    %106 = arith.addf %103, %105 : vector<128x32xf32>
    %c0_47 = arith.constant 0 : index
    %c0_48 = arith.constant 0 : index
    %107 = vector.load %arg13[%c0_47, %c0_48] : memref<128x32xf32, #tpu.memory_space<vmem>>, vector<128x32xf32>
    tpu.vector_store %arg13[%c0_47, %c0_48], %106 {strides = array<i32>} : memref<128x32xf32, #tpu.memory_space<vmem>>, vector<128x32xf32>,
    %c1_i32 = arith.constant 1 : i32
    %108 = arith.cmpi eq, %arg0, %c1_i32 : i32
    %109 = arith.extui %108 : i1 to i32
    %c0_i32_49 = arith.constant 0 : i32
    %110 = arith.cmpi ne, %109, %c0_i32_49 : i32
    scf.if %110 {
      %c0_50 = arith.constant 0 : index
      %c0_51 = arith.constant 0 : index
      %111 = vector.load %arg13[%c0_50, %c0_51] : memref<128x32xf32, #tpu.memory_space<vmem>>, vector<128x32xf32>
      %c0_52 = arith.constant 0 : index
      %c0_53 = arith.constant 0 : index
      %112 = vector.load %arg9[%c0_52, %c0_53] : memref<32x16xf32, #tpu.memory_space<vmem>>, vector<32x16xf32>
      %cst_54 = arith.constant dense<0.000000e+00> : vector<128x16xf32>
      %113 = tpu.matmul %111, %112, %cst_54 {dimension_numbers = #tpu.dot_dimension_numbers<[1], [0], [0], [1], [0, 0, 1, 1], [], []>} : vector<128x32xf32>, vector<32x16xf32>, vector<128x16xf32> -> vector<128x16xf32>
      %c0_55 = arith.constant 0 : index
      %c0_56 = arith.constant 0 : index
      %114 = vector.load %arg10[%c0_55, %c0_56] : memref<1x16xf32, #tpu.memory_space<vmem>>, vector<1x16xf32>
      %115 = vector.broadcast %114 : vector<1x16xf32> to vector<128x16xf32>
      %116 = arith.addf %113, %115 : vector<128x16xf32>
      %c0_57 = arith.constant 0 : index
      %c0_58 = arith.constant 0 : index
      %117 = vector.load %arg12[%c0_57, %c0_58] : memref<128x16xf32, #tpu.memory_space<vmem>>, vector<128x16xf32>
      tpu.vector_store %arg12[%c0_57, %c0_58], %116 {strides = array<i32>} : memref<128x16xf32, #tpu.memory_space<vmem>>, vector<128x16xf32>,
      %cst_59 = arith.constant dense<0.000000e+00> : vector<128x128xf32>
      %118 = tpu.matmul %116, %116, %cst_59 {dimension_numbers = #tpu.dot_dimension_numbers<[1], [1], [0], [0], [0, 0, 1, 0], [], []>} : vector<128x16xf32>, vector<128x16xf32>, vector<128x128xf32> -> vector<128x128xf32>
      %c0_60 = arith.constant 0 : index
      %c0_61 = arith.constant 0 : index
      %119 = vector.load %arg11[%c0_60, %c0_61] : memref<128x128xf32, #tpu.memory_space<vmem>>, vector<128x128xf32>
      tpu.vector_store %arg11[%c0_60, %c0_61], %118 {strides = array<i32>} : memref<128x128xf32, #tpu.memory_space<vmem>>, vector<128x128xf32>,
    } else {
    }
    return
  }
  func.func @transform_0(%arg0: i32) -> (i32, i32, i32) {
    %c0_i32 = arith.constant 0 : i32
    %c0_i32_0 = arith.constant 0 : i32
    %c0_i32_1 = arith.constant 0 : i32
    return %arg0, %c0_i32, %c0_i32_0 : i32, i32, i32
  }
  func.func @transform_1(%arg0: i32) -> (i32, i32, i32) {
    %c0_i32 = arith.constant 0 : i32
    %c0_i32_0 = arith.constant 0 : i32
    %c0_i32_1 = arith.constant 0 : i32
    return %arg0, %c0_i32, %c0_i32_0 : i32, i32, i32
  }
  func.func @transform_2(%arg0: i32) -> (i32, i32, i32) {
    %c0_i32 = arith.constant 0 : i32
    %c0_i32_0 = arith.constant 0 : i32
    %c0_i32_1 = arith.constant 0 : i32
    return %arg0, %c0_i32, %c0_i32_0 : i32, i32, i32
  }
  func.func @transform_3(%arg0: i32) -> (i32, i32, i32) {
    %c0_i32 = arith.constant 0 : i32
    %c0_i32_0 = arith.constant 0 : i32
    %c0_i32_1 = arith.constant 0 : i32
    return %arg0, %c0_i32, %c0_i32_0 : i32, i32, i32
  }
  func.func @transform_4(%arg0: i32) -> (i32, i32, i32) {
    %c0_i32 = arith.constant 0 : i32
    %c0_i32_0 = arith.constant 0 : i32
    %c0_i32_1 = arith.constant 0 : i32
    return %arg0, %c0_i32, %c0_i32_0 : i32, i32, i32
  }
  func.func @transform_5(%arg0: i32) -> (i32, i32, i32) {
    %c0_i32 = arith.constant 0 : i32
    %c0_i32_0 = arith.constant 0 : i32
    %c0_i32_1 = arith.constant 0 : i32
    return %arg0, %c0_i32, %c0_i32_0 : i32, i32, i32
  }
  func.func @transform_6(%arg0: i32) -> (i32, i32, i32) {
    %c0_i32 = arith.constant 0 : i32
    %c0_i32_0 = arith.constant 0 : i32
    %c0_i32_1 = arith.constant 0 : i32
    return %arg0, %c0_i32, %c0_i32_0 : i32, i32, i32
  }
  func.func @transform_7(%arg0: i32) -> (i32, i32, i32) {
    %c0_i32 = arith.constant 0 : i32
    %c0_i32_0 = arith.constant 0 : i32
    %c0_i32_1 = arith.constant 0 : i32
    return %arg0, %c0_i32, %c0_i32_0 : i32, i32, i32
  }
  func.func @transform_8(%arg0: i32) -> (i32, i32) {
    %c0_i32 = arith.constant 0 : i32
    %c0_i32_0 = arith.constant 0 : i32
    %c0_i32_1 = arith.constant 0 : i32
    return %c0_i32, %c0_i32_0 : i32, i32
  }
  func.func @transform_9(%arg0: i32) -> (i32, i32) {
    %c0_i32 = arith.constant 0 : i32
    %c0_i32_0 = arith.constant 0 : i32
    %c0_i32_1 = arith.constant 0 : i32
    return %c0_i32, %c0_i32_0 : i32, i32
  }
  func.func @transform_10(%arg0: i32) -> (i32, i32) {
    %c0_i32 = arith.constant 0 : i32
    %c0_i32_0 = arith.constant 0 : i32
    %c0_i32_1 = arith.constant 0 : i32
    return %c0_i32, %c0_i32_0 : i32, i32
  }
  func.func @transform_11(%arg0: i32) -> (i32, i32) {
    %c0_i32 = arith.constant 0 : i32
    %c0_i32_0 = arith.constant 0 : i32
    %c0_i32_1 = arith.constant 0 : i32
    return %c0_i32, %c0_i32_0 : i32, i32
  }
}

</mosaic_0001>

<llo_original>
// kernel: tpu_custom_call.1
$region0: #{tpu_custom_call.1}
  #allocation0 [shape = 'u32[]', space=smem, size = 0x4, offset = 0x4, fixed_abs, tag = 'smem constant byte address 0x4 - core index']
  #allocation1 [shape = 'u32[144,128]{1,0:T(1,128)}', space=vmem, size = 0x12000, scoped, tag = 'internal scratch']
  #allocation2 [shape = 'f32[128,32]{1,0:T(8,128)}', space=vmem, size = 0x10000, scoped, tag = 'scratch operand']
  %s0 = inlined_call_operand.vmem [shape: f32[2,128,32], index: 0, kind: input, shape index: {}]
  %s1 = inlined_call_operand.vmem [shape: f32[2,32,32], index: 1, kind: input, shape index: {}]
  %s2 = inlined_call_operand.vmem [shape: f32[2,32,32], index: 2, kind: input, shape index: {}]
  %s3 = inlined_call_operand.vmem [shape: f32[2,2,32], index: 3, kind: input, shape index: {}]
  %s4 = inlined_call_operand.vmem [shape: f32[2,2,32], index: 4, kind: input, shape index: {}]
  %s5 = inlined_call_operand.vmem [shape: f32[2,1,32], index: 5, kind: input, shape index: {}]
  %s6 = inlined_call_operand.vmem [shape: f32[2,128,128], index: 6, kind: input, shape index: {}]
  %s7 = inlined_call_operand.vmem [shape: f32[2,128,1], index: 7, kind: input, shape index: {}]
  %s8 = inlined_call_operand.vmem [shape: f32[32,16], index: 8, kind: input, shape index: {}]
  %s9 = inlined_call_operand.vmem [shape: f32[1,16], index: 9, kind: input, shape index: {}]
  %s10 = inlined_call_operand.hbm [shape: f32[128,128], index: 10, kind: output, shape index: {0}]
  %s11 = inlined_call_operand.vmem [shape: f32[128,16], index: 11, kind: output, shape index: {1}]
  %12 = xla_tuple %s10, %s11
  %s13 = sld [smem:[#allocation0]]
  $region89: #{tpu_custom_call.1} parent=0
    _
  %s15 = ssub.s32 1, %s13
  %s16 = scalar_select 0, %s15, %s13
  $region1: #{tpu_custom_call.1} parent=0
    #allocation3 [shape = 'u8[65536]{0}', space=vmem, size = 0x10000, scoped, tag = 'output window, operand 0, single buffered']
    #allocation4 [shape = 's32[2]{0}', space=sflag, size = 0x8, scoped, tag = 'scoped memory for tpu_custom_call.1']
    %17 = vsyncpa [#allocation4], 0
    loop: start=0, step=1, limit=4
    $region2: #{tpu_custom_call.1} parent=1 // loop_pre_header
      _
    $region3: #{tpu_custom_call.1} parent=1 // loop_header
      %s19 = sphi 0, %s23
      %p20 = scmp.ge.s32.totalorder %s19, 4
      %s29 = sphi 0, %s31
      %s32 = sphi 0, %s29
      %s33 = sphi 0, %s32
      %s49 = sphi 0, %s33
      %s55 = sphi 0, %s57
      %s58 = sphi 0, %s55
      %s59 = sphi 0, %s58
      %s75 = sphi 0, %s59
      %s81 = sphi 0, %s83
      %s84 = sphi 0, %s81
      %s85 = sphi 0, %s84
      %s101 = sphi 0, %s85
      %s107 = sphi 0, %s109
      %s110 = sphi 0, %s107
      %s111 = sphi 0, %s110
      %s127 = sphi 0, %s111
      %s133 = sphi 0, %s135
      %s136 = sphi 0, %s133
      %s137 = sphi 0, %s136
      %s153 = sphi 0, %s137
      %s159 = sphi 0, %s161
      %s162 = sphi 0, %s159
      %s163 = sphi 0, %s162
      %s179 = sphi 0, %s163
      %s185 = sphi 0, %s187
      %s188 = sphi 0, %s185
      %s189 = sphi 0, %s188
      %s205 = sphi 0, %s189
      %s211 = sphi 0, %s213
      %s214 = sphi 0, %s211
      %s215 = sphi 0, %s214
      %s231 = sphi 0, %s215
      %s235 = sphi 0, %s235
      %s237 = sphi 0, %s235
      %s238 = sphi 0, %s237
      %s252 = sphi 0, %s238
      %s256 = sphi 0, %s256
      %s258 = sphi 0, %s256
      %s259 = sphi 0, %s258
      %s273 = sphi 0, %s259
      %s277 = sphi 0, %s277
      %s279 = sphi 0, %s277
      %s280 = sphi 0, %s279
      %s294 = sphi 0, %s280
      %s298 = sphi 0, %s298
      %s300 = sphi 0, %s298
      %s301 = sphi 0, %s300
      %s315 = sphi 0, %s301
    $region4: #{tpu_custom_call.1} parent=1 // loop_header_branch
      %22 = sbr.rel (%p20) target = $region8
    $region5: #{tpu_custom_call.1} parent=1 // loop_body
      %s24 = ssub.s32 %s19, 1
      %s25 = ssub.s32 %s19, 2
      %s26 = sadd.s32 %s19, 1
      %s27 = ssub.s32 %s19, %s26
      %p28 = scmp.eq.s32.totalorder %s27, 0
      %s30 = sadd.s32 %s29, 1
      %s31 = scalar_select %p28, %s29, %s30
      %p34 = pneg %p28
      %p35 = scmp.eq.s32.totalorder %s19, 1
      %p36 = por %p34, %p35
      %p37 = scmp.ne.s32.totalorder %s29, %s32
      %p38 = scmp.eq.s32.totalorder %s19, 0
      %p39 = por %p37, %p38
      %p40 = scmp.ne.s32.totalorder %s29, %s32
      %p41 = scmp.eq.s32.totalorder %s24, 1
      %p42 = por %p40, %p41
      %p43 = scmp.ne.s32.totalorder %s32, %s33
      %p44 = scmp.eq.s32.totalorder %s24, 0
      %p45 = por %p43, %p44
      %p46 = scmp.ne.s32.totalorder %s32, %s33
      %p47 = scmp.eq.s32.totalorder %s25, 1
      %p48 = por %p46, %p47
      %p50 = scmp.ne.s32.totalorder %s33, %s49
      %p51 = scmp.eq.s32.totalorder %s25, 0
      %p52 = por %p50, %p51
      %s53 = ssub.s32 %s19, %s26
      %p54 = scmp.eq.s32.totalorder %s53, 0
      %s56 = sadd.s32 %s55, 1
      %s57 = scalar_select %p54, %s55, %s56
      %p60 = pneg %p54
      %p61 = scmp.eq.s32.totalorder %s19, 1
      %p62 = por %p60, %p61
      %p63 = scmp.ne.s32.totalorder %s55, %s58
      %p64 = scmp.eq.s32.totalorder %s19, 0
      %p65 = por %p63, %p64
      %p66 = scmp.ne.s32.totalorder %s55, %s58
      %p67 = scmp.eq.s32.totalorder %s24, 1
      %p68 = por %p66, %p67
      %p69 = scmp.ne.s32.totalorder %s58, %s59
      %p70 = scmp.eq.s32.totalorder %s24, 0
      %p71 = por %p69, %p70
      %p72 = scmp.ne.s32.totalorder %s58, %s59
      %p73 = scmp.eq.s32.totalorder %s25, 1
      %p74 = por %p72, %p73
      %p76 = scmp.ne.s32.totalorder %s59, %s75
      %p77 = scmp.eq.s32.totalorder %s25, 0
      %p78 = por %p76, %p77
      %s79 = ssub.s32 %s19, %s26
      %p80 = scmp.eq.s32.totalorder %s79, 0
      %s82 = sadd.s32 %s81, 1
      %s83 = scalar_select %p80, %s81, %s82
      %p86 = pneg %p80
      %p87 = scmp.eq.s32.totalorder %s19, 1
      %p88 = por %p86, %p87
      %p89 = scmp.ne.s32.totalorder %s81, %s84
      %p90 = scmp.eq.s32.totalorder %s19, 0
      %p91 = por %p89, %p90
      %p92 = scmp.ne.s32.totalorder %s81, %s84
      %p93 = scmp.eq.s32.totalorder %s24, 1
      %p94 = por %p92, %p93
      %p95 = scmp.ne.s32.totalorder %s84, %s85
      %p96 = scmp.eq.s32.totalorder %s24, 0
      %p97 = por %p95, %p96
      %p98 = scmp.ne.s32.totalorder %s84, %s85
      %p99 = scmp.eq.s32.totalorder %s25, 1
      %p100 = por %p98, %p99
      %p102 = scmp.ne.s32.totalorder %s85, %s101
      %p103 = scmp.eq.s32.totalorder %s25, 0
      %p104 = por %p102, %p103
      %s105 = ssub.s32 %s19, %s26
      %p106 = scmp.eq.s32.totalorder %s105, 0
      %s108 = sadd.s32 %s107, 1
      %s109 = scalar_select %p106, %s107, %s108
      %p112 = pneg %p106
      %p113 = scmp.eq.s32.totalorder %s19, 1
      %p114 = por %p112, %p113
      %p115 = scmp.ne.s32.totalorder %s107, %s110
      %p116 = scmp.eq.s32.totalorder %s19, 0
      %p117 = por %p115, %p116
      %p118 = scmp.ne.s32.totalorder %s107, %s110
      %p119 = scmp.eq.s32.totalorder %s24, 1
      %p120 = por %p118, %p119
      %p121 = scmp.ne.s32.totalorder %s110, %s111
      %p122 = scmp.eq.s32.totalorder %s24, 0
      %p123 = por %p121, %p122
      %p124 = scmp.ne.s32.totalorder %s110, %s111
      %p125 = scmp.eq.s32.totalorder %s25, 1
      %p126 = por %p124, %p125
      %p128 = scmp.ne.s32.totalorder %s111, %s127
      %p129 = scmp.eq.s32.totalorder %s25, 0
      %p130 = por %p128, %p129
      %s131 = ssub.s32 %s19, %s26
      %p132 = scmp.eq.s32.totalorder %s131, 0
      %s134 = sadd.s32 %s133, 1
      %s135 = scalar_select %p132, %s133, %s134
      %p138 = pneg %p132
      %p139 = scmp.eq.s32.totalorder %s19, 1
      %p140 = por %p138, %p139
      %p141 = scmp.ne.s32.totalorder %s133, %s136
      %p142 = scmp.eq.s32.totalorder %s19, 0
      %p143 = por %p141, %p142
      %p144 = scmp.ne.s32.totalorder %s133, %s136
      %p145 = scmp.eq.s32.totalorder %s24, 1
      %p146 = por %p144, %p145
      %p147 = scmp.ne.s32.totalorder %s136, %s137
      %p148 = scmp.eq.s32.totalorder %s24, 0
      %p149 = por %p147, %p148
      %p150 = scmp.ne.s32.totalorder %s136, %s137
      %p151 = scmp.eq.s32.totalorder %s25, 1
      %p152 = por %p150, %p151
      %p154 = scmp.ne.s32.totalorder %s137, %s153
      %p155 = scmp.eq.s32.totalorder %s25, 0
      %p156 = por %p154, %p155
      %s157 = ssub.s32 %s19, %s26
      %p158 = scmp.eq.s32.totalorder %s157, 0
      %s160 = sadd.s32 %s159, 1
      %s161 = scalar_select %p158, %s159, %s160
      %p164 = pneg %p158
      %p165 = scmp.eq.s32.totalorder %s19, 1
      %p166 = por %p164, %p165
      %p167 = scmp.ne.s32.totalorder %s159, %s162
      %p168 = scmp.eq.s32.totalorder %s19, 0
      %p169 = por %p167, %p168
      %p170 = scmp.ne.s32.totalorder %s159, %s162
      %p171 = scmp.eq.s32.totalorder %s24, 1
      %p172 = por %p170, %p171
      %p173 = scmp.ne.s32.totalorder %s162, %s163
      %p174 = scmp.eq.s32.totalorder %s24, 0
      %p175 = por %p173, %p174
      %p176 = scmp.ne.s32.totalorder %s162, %s163
      %p177 = scmp.eq.s32.totalorder %s25, 1
      %p178 = por %p176, %p177
      %p180 = scmp.ne.s32.totalorder %s163, %s179
      %p181 = scmp.eq.s32.totalorder %s25, 0
      %p182 = por %p180, %p181
      %s183 = ssub.s32 %s19, %s26
      %p184 = scmp.eq.s32.totalorder %s183, 0
      %s186 = sadd.s32 %s185, 1
      %s187 = scalar_select %p184, %s185, %s186
      %p190 = pneg %p184
      %p191 = scmp.eq.s32.totalorder %s19, 1
      %p192 = por %p190, %p191
      %p193 = scmp.ne.s32.totalorder %s185, %s188
      %p194 = scmp.eq.s32.totalorder %s19, 0
      %p195 = por %p193, %p194
      %p196 = scmp.ne.s32.totalorder %s185, %s188
      %p197 = scmp.eq.s32.totalorder %s24, 1
      %p198 = por %p196, %p197
      %p199 = scmp.ne.s32.totalorder %s188, %s189
      %p200 = scmp.eq.s32.totalorder %s24, 0
      %p201 = por %p199, %p200
      %p202 = scmp.ne.s32.totalorder %s188, %s189
      %p203 = scmp.eq.s32.totalorder %s25, 1
      %p204 = por %p202, %p203
      %p206 = scmp.ne.s32.totalorder %s189, %s205
      %p207 = scmp.eq.s32.totalorder %s25, 0
      %p208 = por %p206, %p207
      %s209 = ssub.s32 %s19, %s26
      %p210 = scmp.eq.s32.totalorder %s209, 0
      %s212 = sadd.s32 %s211, 1
      %s213 = scalar_select %p210, %s211, %s212
      %p216 = pneg %p210
      %p217 = scmp.eq.s32.totalorder %s19, 1
      %p218 = por %p216, %p217
      %p219 = scmp.ne.s32.totalorder %s211, %s214
      %p220 = scmp.eq.s32.totalorder %s19, 0
      %p221 = por %p219, %p220
      %p222 = scmp.ne.s32.totalorder %s211, %s214
      %p223 = scmp.eq.s32.totalorder %s24, 1
      %p224 = por %p222, %p223
      %p225 = scmp.ne.s32.totalorder %s214, %s215
      %p226 = scmp.eq.s32.totalorder %s24, 0
      %p227 = por %p225, %p226
      %p228 = scmp.ne.s32.totalorder %s214, %s215
      %p229 = scmp.eq.s32.totalorder %s25, 1
      %p230 = por %p228, %p229
      %p232 = scmp.ne.s32.totalorder %s215, %s231
      %p233 = scmp.eq.s32.totalorder %s25, 0
      %p234 = por %p232, %p233
      %s236 = sadd.s32 %s235, 1
      %p239 = scmp.eq.s32.totalorder %s19, 1
      %p240 = scmp.ne.s32.totalorder %s235, %s237
      %p241 = scmp.eq.s32.totalorder %s19, 0
      %p242 = por %p240, %p241
      %p243 = scmp.ne.s32.totalorder %s235, %s237
      %p244 = scmp.eq.s32.totalorder %s24, 1
      %p245 = por %p243, %p244
      %p246 = scmp.ne.s32.totalorder %s237, %s238
      %p247 = scmp.eq.s32.totalorder %s24, 0
      %p248 = por %p246, %p247
      %p249 = scmp.ne.s32.totalorder %s237, %s238
      %p250 = scmp.eq.s32.totalorder %s25, 1
      %p251 = por %p249, %p250
      %p253 = scmp.ne.s32.totalorder %s238, %s252
      %p254 = scmp.eq.s32.totalorder %s25, 0
      %p255 = por %p253, %p254
      %s257 = sadd.s32 %s256, 1
      %p260 = scmp.eq.s32.totalorder %s19, 1
      %p261 = scmp.ne.s32.totalorder %s256, %s258
      %p262 = scmp.eq.s32.totalorder %s19, 0
      %p263 = por %p261, %p262
      %p264 = scmp.ne.s32.totalorder %s256, %s258
      %p265 = scmp.eq.s32.totalorder %s24, 1
      %p266 = por %p264, %p265
      %p267 = scmp.ne.s32.totalorder %s258, %s259
      %p268 = scmp.eq.s32.totalorder %s24, 0
      %p269 = por %p267, %p268
      %p270 = scmp.ne.s32.totalorder %s258, %s259
      %p271 = scmp.eq.s32.totalorder %s25, 1
      %p272 = por %p270, %p271
      %p274 = scmp.ne.s32.totalorder %s259, %s273
      %p275 = scmp.eq.s32.totalorder %s25, 0
      %p276 = por %p274, %p275
      %s278 = sadd.s32 %s277, 1
      %p281 = scmp.eq.s32.totalorder %s19, 1
      %p282 = scmp.ne.s32.totalorder %s277, %s279
      %p283 = scmp.eq.s32.totalorder %s19, 0
      %p284 = por %p282, %p283
      %p285 = scmp.ne.s32.totalorder %s277, %s279
      %p286 = scmp.eq.s32.totalorder %s24, 1
      %p287 = por %p285, %p286
      %p288 = scmp.ne.s32.totalorder %s279, %s280
      %p289 = scmp.eq.s32.totalorder %s24, 0
      %p290 = por %p288, %p289
      %p291 = scmp.ne.s32.totalorder %s279, %s280
      %p292 = scmp.eq.s32.totalorder %s25, 1
      %p293 = por %p291, %p292
      %p295 = scmp.ne.s32.totalorder %s280, %s294
      %p296 = scmp.eq.s32.totalorder %s25, 0
      %p297 = por %p295, %p296
      %s299 = sadd.s32 %s298, 1
      %p302 = scmp.eq.s32.totalorder %s19, 1
      %p303 = scmp.ne.s32.totalorder %s298, %s300
      %p304 = scmp.eq.s32.totalorder %s19, 0
      %p305 = por %p303, %p304
      %p306 = scmp.ne.s32.totalorder %s298, %s300
      %p307 = scmp.eq.s32.totalorder %s24, 1
      %p308 = por %p306, %p307
      %p309 = scmp.ne.s32.totalorder %s300, %s301
      %p310 = scmp.eq.s32.totalorder %s24, 0
      %p311 = por %p309, %p310
      %p312 = scmp.ne.s32.totalorder %s300, %s301
      %p313 = scmp.eq.s32.totalorder %s25, 1
      %p314 = por %p312, %p313
      %p316 = scmp.ne.s32.totalorder %s301, %s315
      %p317 = scmp.eq.s32.totalorder %s25, 0
      %p318 = por %p316, %p317
      %p319 = scmp.le.s32.totalorder 1, %s19
      %p320 = scmp.lt.s32.totalorder %s19, 3
      %p321 = pnand %p319, %p320
      %p322 = pneg %p321
      // Predicated region
      $region9: #{tpu_custom_call.1} parent=5 // pred_check
        _
      $region10: #{tpu_custom_call.1} parent=5 // pred_check_branch
        %324 = sbr.rel (%p321) target = $region12
      $region11: #{tpu_custom_call.1} parent=5 // pred_region
        %s325 = ssub.s32 %s19, 1
        // Predicated region
        $region13: #{tpu_custom_call.1} parent=11 // pred_check
          %p326 = pneg %p248
        $region14: #{tpu_custom_call.1} parent=11 // pred_check_branch
          %328 = sbr.rel (%p326) target = $region16
        $region15: #{tpu_custom_call.1} parent=11 // pred_region
          _
        $region16: #{tpu_custom_call.1} parent=11 // pred_fallthru
          _
        // Predicated region
        $region17: #{tpu_custom_call.1} parent=11 // pred_check
          %p329 = pneg %p269
        $region18: #{tpu_custom_call.1} parent=11 // pred_check_branch
          %331 = sbr.rel (%p329) target = $region20
        $region19: #{tpu_custom_call.1} parent=11 // pred_region
          _
        $region20: #{tpu_custom_call.1} parent=11 // pred_fallthru
          _
      $region12: #{tpu_custom_call.1} parent=5 // pred_fallthru
        _
      %p332 = scmp.lt.s32.totalorder %s19, 2
      // Predicated region
      $region21: #{tpu_custom_call.1} parent=5 // pred_check
        %p333 = pneg %p332
      $region22: #{tpu_custom_call.1} parent=5 // pred_check_branch
        %335 = sbr.rel (%p333) target = $region24
      $region23: #{tpu_custom_call.1} parent=5 // pred_region
        // Predicated region
        $region25: #{tpu_custom_call.1} parent=23 // pred_check
          %p336 = pneg %p39
        $region26: #{tpu_custom_call.1} parent=23 // pred_check_branch
          %338 = sbr.rel (%p336) target = $region28
        $region27: #{tpu_custom_call.1} parent=23 // pred_region
          %p339 = scmp.lt.s32.totalorder %s19, 1
          %s340 = scalar_select %p339, %s19, 1
          %s341 = smul.addr %s340, 16
          %s342 = smul.addr %s341, 8
          %s343 = scalar_lea.vmem %s0, %s342
        $region28: #{tpu_custom_call.1} parent=23 // pred_fallthru
          _
        // Predicated region
        $region29: #{tpu_custom_call.1} parent=23 // pred_check
          %p344 = pneg %p65
        $region30: #{tpu_custom_call.1} parent=23 // pred_check_branch
          %346 = sbr.rel (%p344) target = $region32
        $region31: #{tpu_custom_call.1} parent=23 // pred_region
          %p347 = scmp.lt.s32.totalorder %s19, 1
          %s348 = scalar_select %p347, %s19, 1
          %s349 = smul.addr %s348, 4
          %s350 = smul.addr %s349, 8
          %s351 = scalar_lea.vmem %s1, %s350
        $region32: #{tpu_custom_call.1} parent=23 // pred_fallthru
          _
        // Predicated region
        $region33: #{tpu_custom_call.1} parent=23 // pred_check
          %p352 = pneg %p91
        $region34: #{tpu_custom_call.1} parent=23 // pred_check_branch
          %354 = sbr.rel (%p352) target = $region36
        $region35: #{tpu_custom_call.1} parent=23 // pred_region
          %p355 = scmp.lt.s32.totalorder %s19, 1
          %s356 = scalar_select %p355, %s19, 1
          %s357 = smul.addr %s356, 4
          %s358 = smul.addr %s357, 8
          %s359 = scalar_lea.vmem %s2, %s358
        $region36: #{tpu_custom_call.1} parent=23 // pred_fallthru
          _
        // Predicated region
        $region37: #{tpu_custom_call.1} parent=23 // pred_check
          %p360 = pneg %p117
        $region38: #{tpu_custom_call.1} parent=23 // pred_check_branch
          %362 = sbr.rel (%p360) target = $region40
        $region39: #{tpu_custom_call.1} parent=23 // pred_region
          %p363 = scmp.lt.s32.totalorder %s19, 1
          %s364 = scalar_select %p363, %s19, 1
          %s365 = smul.addr %s364, 2
          %s366 = scalar_lea.vmem %s3, %s365
        $region40: #{tpu_custom_call.1} parent=23 // pred_fallthru
          _
        // Predicated region
        $region41: #{tpu_custom_call.1} parent=23 // pred_check
          %p367 = pneg %p143
        $region42: #{tpu_custom_call.1} parent=23 // pred_check_branch
          %369 = sbr.rel (%p367) target = $region44
        $region43: #{tpu_custom_call.1} parent=23 // pred_region
          %p370 = scmp.lt.s32.totalorder %s19, 1
          %s371 = scalar_select %p370, %s19, 1
          %s372 = smul.addr %s371, 2
          %s373 = scalar_lea.vmem %s4, %s372
        $region44: #{tpu_custom_call.1} parent=23 // pred_fallthru
          _
        // Predicated region
        $region45: #{tpu_custom_call.1} parent=23 // pred_check
          %p374 = pneg %p169
        $region46: #{tpu_custom_call.1} parent=23 // pred_check_branch
          %376 = sbr.rel (%p374) target = $region48
        $region47: #{tpu_custom_call.1} parent=23 // pred_region
          %p377 = scmp.lt.s32.totalorder %s19, 1
          %s378 = scalar_select %p377, %s19, 1
          %s379 = scalar_lea.vmem %s5, %s378
        $region48: #{tpu_custom_call.1} parent=23 // pred_fallthru
          _
        // Predicated region
        $region49: #{tpu_custom_call.1} parent=23 // pred_check
          %p380 = pneg %p195
        $region50: #{tpu_custom_call.1} parent=23 // pred_check_branch
          %382 = sbr.rel (%p380) target = $region52
        $region51: #{tpu_custom_call.1} parent=23 // pred_region
          %p383 = scmp.lt.s32.totalorder %s19, 1
          %s384 = scalar_select %p383, %s19, 1
          %s385 = smul.addr %s384, 16
          %s386 = smul.addr %s385, 8
          %s387 = scalar_lea.vmem %s6, %s386
        $region52: #{tpu_custom_call.1} parent=23 // pred_fallthru
          _
        // Predicated region
        $region53: #{tpu_custom_call.1} parent=23 // pred_check
          %p388 = pneg %p221
        $region54: #{tpu_custom_call.1} parent=23 // pred_check_branch
          %390 = sbr.rel (%p388) target = $region56
        $region55: #{tpu_custom_call.1} parent=23 // pred_region
          %p391 = scmp.lt.s32.totalorder %s19, 1
          %s392 = scalar_select %p391, %s19, 1
          %s393 = smul.addr %s392, 16
          %s394 = smul.addr %s393, 8
          %s395 = scalar_lea.vmem %s7, %s394
        $region56: #{tpu_custom_call.1} parent=23 // pred_fallthru
          _
      $region24: #{tpu_custom_call.1} parent=5 // pred_fallthru
        _
      %p396 = scmp.le.s32.totalorder 1, %s19
      %p397 = scmp.lt.s32.totalorder %s19, 3
      %p398 = pnand %p396, %p397
      %p399 = pneg %p398
      // Predicated region
      $region57: #{tpu_custom_call.1} parent=5 // pred_check
        _
      $region58: #{tpu_custom_call.1} parent=5 // pred_check_branch
        %401 = sbr.rel (%p398) target = $region60
      $region59: #{tpu_custom_call.1} parent=5 // pred_region
        %s402 = ssub.s32 %s19, 1
        %p403 = scmp.lt.s32.totalorder %s24, 1
        %s404 = scalar_select %p403, %s24, 1
        %s405 = smul.addr %s404, 16
        %s406 = smul.addr %s405, 8
        %s407 = scalar_lea.vmem %s0, %s406
        %p408 = pneg %p45
        %p409 = pneg %p42
        %p410 = scmp.lt.s32.totalorder %s24, 1
        %s411 = scalar_select %p410, %s24, 1
        %s412 = smul.addr %s411, 4
        %s413 = smul.addr %s412, 8
        %s414 = scalar_lea.vmem %s1, %s413
        %p415 = pneg %p71
        %p416 = pneg %p68
        %p417 = scmp.lt.s32.totalorder %s24, 1
        %s418 = scalar_select %p417, %s24, 1
        %s419 = smul.addr %s418, 4
        %s420 = smul.addr %s419, 8
        %s421 = scalar_lea.vmem %s2, %s420
        %p422 = pneg %p97
        %p423 = pneg %p94
        %p424 = scmp.lt.s32.totalorder %s24, 1
        %s425 = scalar_select %p424, %s24, 1
        %s426 = smul.addr %s425, 2
        %s427 = scalar_lea.vmem %s3, %s426
        %p428 = pneg %p123
        %p429 = pneg %p120
        %p430 = scmp.lt.s32.totalorder %s24, 1
        %s431 = scalar_select %p430, %s24, 1
        %s432 = smul.addr %s431, 2
        %s433 = scalar_lea.vmem %s4, %s432
        %p434 = pneg %p149
        %p435 = pneg %p146
        %p436 = scmp.lt.s32.totalorder %s24, 1
        %s437 = scalar_select %p436, %s24, 1
        %s438 = scalar_lea.vmem %s5, %s437
        %p439 = pneg %p175
        %p440 = pneg %p172
        %p441 = scmp.lt.s32.totalorder %s24, 1
        %s442 = scalar_select %p441, %s24, 1
        %s443 = smul.addr %s442, 16
        %s444 = smul.addr %s443, 8
        %s445 = scalar_lea.vmem %s6, %s444
        %p446 = pneg %p201
        %p447 = pneg %p198
        %p448 = scmp.lt.s32.totalorder %s24, 1
        %s449 = scalar_select %p448, %s24, 1
        %s450 = smul.addr %s449, 16
        %s451 = smul.addr %s450, 8
        %s452 = scalar_lea.vmem %s7, %s451
        %p453 = pneg %p227
        %p454 = pneg %p224
        %p455 = pneg %p248
        %p456 = pneg %p245
        %p457 = pneg %p269
        %p458 = pneg %p266
        %p459 = pneg %p290
        %p460 = pneg %p287
        %p461 = pneg %p311
        %p462 = pneg %p308
        %p463 = scmp.lt.s32.totalorder %s24, 1
        %s464 = scalar_select %p463, %s24, 1
        %s465 = smul.addr %s464, 16
        %s466 = smul.addr %s465, 8
        %s467 = scalar_lea.vmem %s0, %s466
        %p468 = scmp.lt.s32.totalorder %s24, 1
        %s469 = scalar_select %p468, %s24, 1
        %s470 = smul.addr %s469, 4
        %s471 = smul.addr %s470, 8
        %s472 = scalar_lea.vmem %s1, %s471
        %p473 = scmp.lt.s32.totalorder %s24, 1
        %s474 = scalar_select %p473, %s24, 1
        %s475 = smul.addr %s474, 4
        %s476 = smul.addr %s475, 8
        %s477 = scalar_lea.vmem %s2, %s476
        %p478 = scmp.lt.s32.totalorder %s24, 1
        %s479 = scalar_select %p478, %s24, 1
        %s480 = smul.addr %s479, 2
        %s481 = scalar_lea.vmem %s3, %s480
        %p482 = scmp.lt.s32.totalorder %s24, 1
        %s483 = scalar_select %p482, %s24, 1
        %s484 = smul.addr %s483, 2
        %s485 = scalar_lea.vmem %s4, %s484
        %p486 = scmp.lt.s32.totalorder %s24, 1
        %s487 = scalar_select %p486, %s24, 1
        %s488 = scalar_lea.vmem %s5, %s487
        %p489 = scmp.lt.s32.totalorder %s24, 1
        %s490 = scalar_select %p489, %s24, 1
        %s491 = smul.addr %s490, 16
        %s492 = smul.addr %s491, 8
        %s493 = scalar_lea.vmem %s6, %s492
        %p494 = scmp.lt.s32.totalorder %s24, 1
        %s495 = scalar_select %p494, %s24, 1
        %s496 = smul.addr %s495, 16
        %s497 = smul.addr %s496, 8
        %s498 = scalar_lea.vmem %s7, %s497
        %p502 = scmp.eq.s32.totalorder %s24, 0
        // Predicated region
        $region61: #{tpu_custom_call.1} parent=59 // pred_check
          %p503 = pneg %p502
        $region62: #{tpu_custom_call.1} parent=59 // pred_check_branch
          %505 = sbr.rel (%p503) target = $region64
        $region63: #{tpu_custom_call.1} parent=59 // pred_region
          %vm506 = vcmask 261120
          %507 = vst.msk [vmem:[#allocation2] sm:$0xff] %vm506, 0.0
          %508 = vst.msk [vmem:[#allocation2 + $0x8] sm:$0xff] %vm506, 0.0
          %509 = vst.msk [vmem:[#allocation2 + $0x10] sm:$0xff] %vm506, 0.0
          %510 = vst.msk [vmem:[#allocation2 + $0x18] sm:$0xff] %vm506, 0.0
          %511 = vst.msk [vmem:[#allocation2 + $0x20] sm:$0xff] %vm506, 0.0
          %512 = vst.msk [vmem:[#allocation2 + $0x28] sm:$0xff] %vm506, 0.0
          %513 = vst.msk [vmem:[#allocation2 + $0x30] sm:$0xff] %vm506, 0.0
          %514 = vst.msk [vmem:[#allocation2 + $0x38] sm:$0xff] %vm506, 0.0
          %515 = vst.msk [vmem:[#allocation2 + $0x40] sm:$0xff] %vm506, 0.0
          %516 = vst.msk [vmem:[#allocation2 + $0x48] sm:$0xff] %vm506, 0.0
          %517 = vst.msk [vmem:[#allocation2 + $0x50] sm:$0xff] %vm506, 0.0
          %518 = vst.msk [vmem:[#allocation2 + $0x58] sm:$0xff] %vm506, 0.0
          %519 = vst.msk [vmem:[#allocation2 + $0x60] sm:$0xff] %vm506, 0.0
          %520 = vst.msk [vmem:[#allocation2 + $0x68] sm:$0xff] %vm506, 0.0
          %521 = vst.msk [vmem:[#allocation2 + $0x70] sm:$0xff] %vm506, 0.0
          %522 = vst.msk [vmem:[#allocation2 + $0x78] sm:$0xff] %vm506, 0.0
        $region64: #{tpu_custom_call.1} parent=59 // pred_fallthru
          _
        %v523 = vld [vmem:[%s467] sm:$0xff]
        %v524 = vld [vmem:[%s467 + $0x8] sm:$0xff]
        %v525 = vld [vmem:[%s467 + $0x10] sm:$0xff]
        %v526 = vld [vmem:[%s467 + $0x18] sm:$0xff]
        %v527 = vld [vmem:[%s467 + $0x20] sm:$0xff]
        %v528 = vld [vmem:[%s467 + $0x28] sm:$0xff]
        %v529 = vld [vmem:[%s467 + $0x30] sm:$0xff]
        %v530 = vld [vmem:[%s467 + $0x38] sm:$0xff]
        %v531 = vld [vmem:[%s467 + $0x40] sm:$0xff]
        %v532 = vld [vmem:[%s467 + $0x48] sm:$0xff]
        %v533 = vld [vmem:[%s467 + $0x50] sm:$0xff]
        %v534 = vld [vmem:[%s467 + $0x58] sm:$0xff]
        %v535 = vld [vmem:[%s467 + $0x60] sm:$0xff]
        %v536 = vld [vmem:[%s467 + $0x68] sm:$0xff]
        %v537 = vld [vmem:[%s467 + $0x70] sm:$0xff]
        %v538 = vld [vmem:[%s467 + $0x78] sm:$0xff]
        %v539 = vld [vmem:[%s472] sm:$0xff]
        %v540 = vld [vmem:[%s472 + $0x8] sm:$0xff]
        %v541 = vld [vmem:[%s472 + $0x10] sm:$0xff]
        %v542 = vld [vmem:[%s472 + $0x18] sm:$0xff]
        %v543 = vld [vmem:[%s477] sm:$0xff]
        %v544 = vld [vmem:[%s477 + $0x8] sm:$0xff]
        %v545 = vld [vmem:[%s477 + $0x10] sm:$0xff]
        %v546 = vld [vmem:[%s477 + $0x18] sm:$0xff]
        %v547 = vld [vmem:[%s493] sm:$0xff]
        %v548 = vld [vmem:[%s493 + $0x8] sm:$0xff]
        %v549 = vld [vmem:[%s493 + $0x10] sm:$0xff]
        %v550 = vld [vmem:[%s493 + $0x18] sm:$0xff]
        %v551 = vld [vmem:[%s493 + $0x20] sm:$0xff]
        %v552 = vld [vmem:[%s493 + $0x28] sm:$0xff]
        %v553 = vld [vmem:[%s493 + $0x30] sm:$0xff]
        %v554 = vld [vmem:[%s493 + $0x38] sm:$0xff]
        %v555 = vld [vmem:[%s493 + $0x40] sm:$0xff]
        %v556 = vld [vmem:[%s493 + $0x48] sm:$0xff]
        %v557 = vld [vmem:[%s493 + $0x50] sm:$0xff]
        %v558 = vld [vmem:[%s493 + $0x58] sm:$0xff]
        %v559 = vld [vmem:[%s493 + $0x60] sm:$0xff]
        %v560 = vld [vmem:[%s493 + $0x68] sm:$0xff]
        %v561 = vld [vmem:[%s493 + $0x70] sm:$0xff]
        %v562 = vld [vmem:[%s493 + $0x78] sm:$0xff]
        %v563 = vld [vmem:[%s481] sm:$0x3]
        %v564 = vld [vmem:[%s485] sm:$0x3]
        %v565 = vld [vmem:[%s488] sm:$0x1]
        %v566 = vld [vmem:[%s498] sm:$0xff]
        %v567 = vld [vmem:[%s498 + $0x8] sm:$0xff]
        %v568 = vld [vmem:[%s498 + $0x10] sm:$0xff]
        %v569 = vld [vmem:[%s498 + $0x18] sm:$0xff]
        %v570 = vld [vmem:[%s498 + $0x20] sm:$0xff]
        %v571 = vld [vmem:[%s498 + $0x28] sm:$0xff]
        %v572 = vld [vmem:[%s498 + $0x30] sm:$0xff]
        %v573 = vld [vmem:[%s498 + $0x38] sm:$0xff]
        %v574 = vld [vmem:[%s498 + $0x40] sm:$0xff]
        %v575 = vld [vmem:[%s498 + $0x48] sm:$0xff]
        %v576 = vld [vmem:[%s498 + $0x50] sm:$0xff]
        %v577 = vld [vmem:[%s498 + $0x58] sm:$0xff]
        %v578 = vld [vmem:[%s498 + $0x60] sm:$0xff]
        %v579 = vld [vmem:[%s498 + $0x68] sm:$0xff]
        %v580 = vld [vmem:[%s498 + $0x70] sm:$0xff]
        %v581 = vld [vmem:[%s498 + $0x78] sm:$0xff]
        %v582 = vpack.c.bf16 %v524, %v523
        %v583 = vpack.c.bf16 %v526, %v525
        %v584 = vpack.c.bf16 %v528, %v527
        %v585 = vpack.c.bf16 %v530, %v529
        %v586 = vpack.c.bf16 %v532, %v531
        %v587 = vpack.c.bf16 %v534, %v533
        %v588 = vpack.c.bf16 %v536, %v535
        %v589 = vpack.c.bf16 %v538, %v537
        %v590 = vpack.c.bf16 %v540, %v539
        %v591 = vpack.c.bf16 %v542, %v541
        %vm592 = vcmask 261120
        %v594 = vsel %vm592, %v582, 0
        %v597 = vsel %vm592, %v583, 0
        %v600 = vsel %vm592, %v584, 0
        %v603 = vsel %vm592, %v585, 0
        %v606 = vsel %vm592, %v586, 0
        %v609 = vsel %vm592, %v587, 0
        %v612 = vsel %vm592, %v588, 0
        %v615 = vsel %vm592, %v589, 0
        %617 = vmatprep.subr.bf16.mxu0 0
        %618 = vmatpush1.bf16.msra.mxu0 %v590
        %619 = vmatprep.subr.bf16.mxu0 0
        %620 = vmatpush1.bf16.msra.mxu0 %v591
        %621 = vmatprep.subr.bf16.mxu0 0
        %622 = vmatpush1.bf16.msra.mxu0 0
        %623 = vmatprep.subr.bf16.mxu0 0
        %624 = vmatpush1.bf16.msra.mxu0 0
        %625 = vmatprep.subr.bf16.mxu0 0
        %626 = vmatpush1.bf16.msra.mxu0 0
        %627 = vmatprep.subr.bf16.mxu0 0
        %628 = vmatpush1.bf16.msra.mxu0 0
        %629 = vmatprep.subr.bf16.mxu0 0
        %630 = vmatpush1.bf16.msra.mxu0 0
        %631 = vmatprep.subr.bf16.mxu0 0
        %632 = vmatpush1.bf16.msra.mxu0 0
        %633 = vmatprep.subr.bf16.mxu0 0
        %634 = vmatpush1.bf16.msra.mxu0 0
        %635 = vmatprep.subr.bf16.mxu0 0
        %636 = vmatpush1.bf16.msra.mxu0 0
        %637 = vmatprep.subr.bf16.mxu0 0
        %638 = vmatpush1.bf16.msra.mxu0 0
        %639 = vmatprep.subr.bf16.mxu0 0
        %640 = vmatpush1.bf16.msra.mxu0 0
        %641 = vmatprep.subr.bf16.mxu0 0
        %642 = vmatpush1.bf16.msra.mxu0 0
        %643 = vmatprep.subr.bf16.mxu0 0
        %644 = vmatpush1.bf16.msra.mxu0 0
        %645 = vmatprep.subr.bf16.mxu0 0
        %646 = vmatpush1.bf16.msra.mxu0 0
        %647 = vmatprep.subr.bf16.mxu0 0
        %648 = vmatpush1.bf16.msra.mxu0 0
        %649 = vmatprep.mubr.bf16.mxu0 0
        %650 = vmatmul.mubr.bf16.gmra.mrb[0].mxu0 %v594
        %v651 = vpop.f32.mrb[0].mxu0
        %v652 = vadd.f32 0.0, %v651
        %v653 = vpop.f32.mrb[0].mxu0
        %v654 = vpop.f32.mrb[0].mxu0
        %v655 = vadd.f32 0.0, %v654
        %v656 = vpop.f32.mrb[0].mxu0
        %657 = vmatprep.mubr.bf16.mxu0 0
        %658 = vmatmul.mubr.bf16.gmra.mrb[0].mxu0 %v597
        %v659 = vpop.f32.mrb[0].mxu0
        %v660 = vadd.f32 0.0, %v659
        %v661 = vpop.f32.mrb[0].mxu0
        %v662 = vpop.f32.mrb[0].mxu0
        %v663 = vadd.f32 0.0, %v662
        %v664 = vpop.f32.mrb[0].mxu0
        %665 = vmatprep.mubr.bf16.mxu0 0
        %666 = vmatmul.mubr.bf16.gmra.mrb[0].mxu0 %v600
        %v667 = vpop.f32.mrb[0].mxu0
        %v668 = vadd.f32 0.0, %v667
        %v669 = vpop.f32.mrb[0].mxu0
        %v670 = vpop.f32.mrb[0].mxu0
        %v671 = vadd.f32 0.0, %v670
        %v672 = vpop.f32.mrb[0].mxu0
        %673 = vmatprep.mubr.bf16.mxu0 0
        %674 = vmatmul.mubr.bf16.gmra.mrb[0].mxu0 %v603
        %v675 = vpop.f32.mrb[0].mxu0
        %v676 = vadd.f32 0.0, %v675
        %v677 = vpop.f32.mrb[0].mxu0
        %v678 = vpop.f32.mrb[0].mxu0
        %v679 = vadd.f32 0.0, %v678
        %v680 = vpop.f32.mrb[0].mxu0
        %681 = vmatprep.mubr.bf16.mxu0 0
        %682 = vmatmul.mubr.bf16.gmra.mrb[0].mxu0 %v606
        %v683 = vpop.f32.mrb[0].mxu0
        %v684 = vadd.f32 0.0, %v683
        %v685 = vpop.f32.mrb[0].mxu0
        %v686 = vpop.f32.mrb[0].mxu0
        %v687 = vadd.f32 0.0, %v686
        %v688 = vpop.f32.mrb[0].mxu0
        %689 = vmatprep.mubr.bf16.mxu0 0
        %690 = vmatmul.mubr.bf16.gmra.mrb[0].mxu0 %v609
        %v691 = vpop.f32.mrb[0].mxu0
        %v692 = vadd.f32 0.0, %v691
        %v693 = vpop.f32.mrb[0].mxu0
        %v694 = vpop.f32.mrb[0].mxu0
        %v695 = vadd.f32 0.0, %v694
        %v696 = vpop.f32.mrb[0].mxu0
        %697 = vmatprep.mubr.bf16.mxu0 0
        %698 = vmatmul.mubr.bf16.gmra.mrb[0].mxu0 %v612
        %v699 = vpop.f32.mrb[0].mxu0
        %v700 = vadd.f32 0.0, %v699
        %v701 = vpop.f32.mrb[0].mxu0
        %v702 = vpop.f32.mrb[0].mxu0
        %v703 = vadd.f32 0.0, %v702
        %v704 = vpop.f32.mrb[0].mxu0
        %705 = vmatprep.mubr.bf16.mxu0 0
        %706 = vmatmul.mubr.bf16.gmra.mrb[0].mxu0 %v615
        %v707 = vpop.f32.mrb[0].mxu0
        %v708 = vadd.f32 0.0, %v707
        %v709 = vpop.f32.mrb[0].mxu0
        %v710 = vpop.f32.mrb[0].mxu0
        %v711 = vadd.f32 0.0, %v710
        %v712 = vpop.f32.mrb[0].mxu0
        %713 = vdwg.mxu0
        %v714 = vpack.c.bf16 %v544, %v543
        %v715 = vpack.c.bf16 %v546, %v545
        %716 = vmatprep.subr.bf16.mxu0 0
        %717 = vmatpush1.bf16.msra.mxu0 %v714
        %718 = vmatprep.subr.bf16.mxu0 0
        %719 = vmatpush1.bf16.msra.mxu0 %v715
        %720 = vmatprep.subr.bf16.mxu0 0
        %721 = vmatpush1.bf16.msra.mxu0 0
        %722 = vmatprep.subr.bf16.mxu0 0
        %723 = vmatpush1.bf16.msra.mxu0 0
        %724 = vmatprep.subr.bf16.mxu0 0
        %725 = vmatpush1.bf16.msra.mxu0 0
        %726 = vmatprep.subr.bf16.mxu0 0
        %727 = vmatpush1.bf16.msra.mxu0 0
        %728 = vmatprep.subr.bf16.mxu0 0
        %729 = vmatpush1.bf16.msra.mxu0 0
        %730 = vmatprep.subr.bf16.mxu0 0
        %731 = vmatpush1.bf16.msra.mxu0 0
        %732 = vmatprep.subr.bf16.mxu0 0
        %733 = vmatpush1.bf16.msra.mxu0 0
        %734 = vmatprep.subr.bf16.mxu0 0
        %735 = vmatpush1.bf16.msra.mxu0 0
        %736 = vmatprep.subr.bf16.mxu0 0
        %737 = vmatpush1.bf16.msra.mxu0 0
        %738 = vmatprep.subr.bf16.mxu0 0
        %739 = vmatpush1.bf16.msra.mxu0 0
        %740 = vmatprep.subr.bf16.mxu0 0
        %741 = vmatpush1.bf16.msra.mxu0 0
        %742 = vmatprep.subr.bf16.mxu0 0
        %743 = vmatpush1.bf16.msra.mxu0 0
        %744 = vmatprep.subr.bf16.mxu0 0
        %745 = vmatpush1.bf16.msra.mxu0 0
        %746 = vmatprep.subr.bf16.mxu0 0
        %747 = vmatpush1.bf16.msra.mxu0 0
        %748 = vmatprep.mubr.bf16.mxu0 0
        %749 = vmatmul.mubr.bf16.gmra.mrb[0].mxu0 %v594
        %v750 = vpop.f32.mrb[0].mxu0
        %v751 = vadd.f32 0.0, %v750
        %v752 = vpop.f32.mrb[0].mxu0
        %v753 = vpop.f32.mrb[0].mxu0
        %v754 = vadd.f32 0.0, %v753
        %v755 = vpop.f32.mrb[0].mxu0
        %756 = vmatprep.mubr.bf16.mxu0 0
        %757 = vmatmul.mubr.bf16.gmra.mrb[0].mxu0 %v597
        %v758 = vpop.f32.mrb[0].mxu0
        %v759 = vadd.f32 0.0, %v758
        %v760 = vpop.f32.mrb[0].mxu0
        %v761 = vpop.f32.mrb[0].mxu0
        %v762 = vadd.f32 0.0, %v761
        %v763 = vpop.f32.mrb[0].mxu0
        %764 = vmatprep.mubr.bf16.mxu0 0
        %765 = vmatmul.mubr.bf16.gmra.mrb[0].mxu0 %v600
        %v766 = vpop.f32.mrb[0].mxu0
        %v767 = vadd.f32 0.0, %v766
        %v768 = vpop.f32.mrb[0].mxu0
        %v769 = vpop.f32.mrb[0].mxu0
        %v770 = vadd.f32 0.0, %v769
        %v771 = vpop.f32.mrb[0].mxu0
        %772 = vmatprep.mubr.bf16.mxu0 0
        %773 = vmatmul.mubr.bf16.gmra.mrb[0].mxu0 %v603
        %v774 = vpop.f32.mrb[0].mxu0
        %v775 = vadd.f32 0.0, %v774
        %v776 = vpop.f32.mrb[0].mxu0
        %v777 = vpop.f32.mrb[0].mxu0
        %v778 = vadd.f32 0.0, %v777
        %v779 = vpop.f32.mrb[0].mxu0
        %780 = vmatprep.mubr.bf16.mxu0 0
        %781 = vmatmul.mubr.bf16.gmra.mrb[0].mxu0 %v606
        %v782 = vpop.f32.mrb[0].mxu0
        %v783 = vadd.f32 0.0, %v782
        %v784 = vpop.f32.mrb[0].mxu0
        %v785 = vpop.f32.mrb[0].mxu0
        %v786 = vadd.f32 0.0, %v785
        %v787 = vpop.f32.mrb[0].mxu0
        %788 = vmatprep.mubr.bf16.mxu0 0
        %789 = vmatmul.mubr.bf16.gmra.mrb[0].mxu0 %v609
        %v790 = vpop.f32.mrb[0].mxu0
        %v791 = vadd.f32 0.0, %v790
        %v792 = vpop.f32.mrb[0].mxu0
        %v793 = vpop.f32.mrb[0].mxu0
        %v794 = vadd.f32 0.0, %v793
        %v795 = vpop.f32.mrb[0].mxu0
        %796 = vmatprep.mubr.bf16.mxu0 0
        %797 = vmatmul.mubr.bf16.gmra.mrb[0].mxu0 %v612
        %v798 = vpop.f32.mrb[0].mxu0
        %v799 = vadd.f32 0.0, %v798
        %v800 = vpop.f32.mrb[0].mxu0
        %v801 = vpop.f32.mrb[0].mxu0
        %v802 = vadd.f32 0.0, %v801
        %v803 = vpop.f32.mrb[0].mxu0
        %804 = vmatprep.mubr.bf16.mxu0 0
        %805 = vmatmul.mubr.bf16.gmra.mrb[0].mxu0 %v615
        %v806 = vpop.f32.mrb[0].mxu0
        %v807 = vadd.f32 0.0, %v806
        %v808 = vpop.f32.mrb[0].mxu0
        %v809 = vpop.f32.mrb[0].mxu0
        %v810 = vadd.f32 0.0, %v809
        %v811 = vpop.f32.mrb[0].mxu0
        %812 = vdwg.mxu0
        %v814 = vsel %vm592, %v563, 0
        %v817 = vsel %vm592, %v652, 0
        %v820 = vsel %vm592, %v655, 0
        %v823 = vsel %vm592, %v660, 0
        %v826 = vsel %vm592, %v663, 0
        %v829 = vsel %vm592, %v668, 0
        %v832 = vsel %vm592, %v671, 0
        %v835 = vsel %vm592, %v676, 0
        %v838 = vsel %vm592, %v679, 0
        %v841 = vsel %vm592, %v684, 0
        %v844 = vsel %vm592, %v687, 0
        %v847 = vsel %vm592, %v692, 0
        %v850 = vsel %vm592, %v695, 0
        %v853 = vsel %vm592, %v700, 0
        %v856 = vsel %vm592, %v703, 0
        %v859 = vsel %vm592, %v708, 0
        %v862 = vsel %vm592, %v711, 0
        %864 = vmatprep.subr.mxu0 0.0
        %865 = vmatpush1.xpose.msra.mxu0 %v817
        %866 = vmatprep.subr.mxu0 0.0
        %867 = vmatpush1.xpose.msra.mxu0 %v820
        %868 = vmatprep.subr.mxu0 0.0
        %869 = vmatpush1.xpose.msra.mxu0 %v823
        %870 = vmatprep.subr.mxu0 0.0
        %871 = vmatpush1.xpose.msra.mxu0 %v826
        %872 = vmatprep.subr.mxu0 0.0
        %873 = vmatpush1.xpose.msra.mxu0 %v829
        %874 = vmatprep.subr.mxu0 0.0
        %875 = vmatpush1.xpose.msra.mxu0 %v832
        %876 = vmatprep.subr.mxu0 0.0
        %877 = vmatpush1.xpose.msra.mxu0 %v835
        %878 = vmatprep.subr.mxu0 0.0
        %879 = vmatpush1.xpose.msra.mxu0 %v838
        %880 = vmatprep.subr.mxu0 0.0
        %881 = vmatpush1.xpose.msra.mxu0 %v841
        %882 = vmatprep.subr.mxu0 0.0
        %883 = vmatpush1.xpose.msra.mxu0 %v844
        %884 = vmatprep.subr.mxu0 0.0
        %885 = vmatpush1.xpose.msra.mxu0 %v847
        %886 = vmatprep.subr.mxu0 0.0
        %887 = vmatpush1.xpose.msra.mxu0 %v850
        %888 = vmatprep.subr.mxu0 0.0
        %889 = vmatpush1.xpose.msra.mxu0 %v853
        %890 = vmatprep.subr.mxu0 0.0
        %891 = vmatpush1.xpose.msra.mxu0 %v856
        %892 = vmatprep.subr.mxu0 0.0
        %893 = vmatpush1.xpose.msra.mxu0 %v859
        %894 = vmatprep.subr.mxu0 0.0
        %895 = vmatpush1.xpose.msra.mxu0 %v862
        %896 = vmatprep.subr.mxu0 0.0
        %897 = vmatpush1.xpose.msra.mxu0 0.0
        %898 = vmatprep.subr.mxu0 0.0
        %899 = vmatpush1.xpose.msra.mxu0 0.0
        %900 = vmatprep.subr.mxu0 0.0
        %901 = vmatpush1.xpose.msra.mxu0 0.0
        %902 = vmatprep.subr.mxu0 0.0
        %903 = vmatpush1.xpose.msra.mxu0 0.0
        %904 = vmatprep.subr.mxu0 0.0
        %905 = vmatpush1.xpose.msra.mxu0 0.0
        %906 = vmatprep.subr.mxu0 0.0
        %907 = vmatpush1.xpose.msra.mxu0 0.0
        %908 = vmatprep.subr.mxu0 0.0
        %909 = vmatpush1.xpose.msra.mxu0 0.0
        %910 = vmatprep.subr.mxu0 0.0
        %911 = vmatpush1.xpose.msra.mxu0 0.0
        %912 = vmatprep.subr.mxu0 0.0
        %913 = vmatpush1.xpose.msra.mxu0 0.0
        %914 = vmatprep.subr.mxu0 0.0
        %915 = vmatpush1.xpose.msra.mxu0 0.0
        %916 = vmatprep.subr.mxu0 0.0
        %917 = vmatpush1.xpose.msra.mxu0 0.0
        %918 = vmatprep.subr.mxu0 0.0
        %919 = vmatpush1.xpose.msra.mxu0 0.0
        %920 = vmatprep.subr.mxu0 0.0
        %921 = vmatpush1.xpose.msra.mxu0 0.0
        %922 = vmatprep.subr.mxu0 0.0
        %923 = vmatpush1.xpose.msra.mxu0 0.0
        %924 = vmatprep.subr.mxu0 0.0
        %925 = vmatpush1.xpose.msra.mxu0 0.0
        %926 = vmatprep.subr.mxu0 0.0
        %927 = vmatpush1.xpose.msra.mxu0 0.0
        %928 = vmatprep.mubr.f32.mxu0 0.0
        %929 = vmatmul.mubr.f32.gmra.mrb[0].mxu0 %v814
        %v930 = vpop.f32.mrb[0].mxu0
        %v931 = vadd.f32 0.0, %v930
        %v932 = vpop.f32.mrb[0].mxu0
        %933 = vdwg.mxu0
        %v935 = vsel %vm592, %v751, 0
        %v938 = vsel %vm592, %v754, 0
        %v941 = vsel %vm592, %v759, 0
        %v944 = vsel %vm592, %v762, 0
        %v947 = vsel %vm592, %v767, 0
        %v950 = vsel %vm592, %v770, 0
        %v953 = vsel %vm592, %v775, 0
        %v956 = vsel %vm592, %v778, 0
        %v959 = vsel %vm592, %v783, 0
        %v962 = vsel %vm592, %v786, 0
        %v965 = vsel %vm592, %v791, 0
        %v968 = vsel %vm592, %v794, 0
        %v971 = vsel %vm592, %v799, 0
        %v974 = vsel %vm592, %v802, 0
        %v977 = vsel %vm592, %v807, 0
        %v980 = vsel %vm592, %v810, 0
        %v983 = vsel %vm592, %v564, 0
        %985 = vmatprep.subr.mxu0 0.0
        %986 = vmatpush1.xpose.msra.mxu0 %v983
        %987 = vmatprep.subr.mxu0 0.0
        %988 = vmatpush1.xpose.msra.mxu0 0.0
        %989 = vmatprep.subr.mxu0 0.0
        %990 = vmatpush1.xpose.msra.mxu0 0.0
        %991 = vmatprep.subr.mxu0 0.0
        %992 = vmatpush1.xpose.msra.mxu0 0.0
        %993 = vmatprep.subr.mxu0 0.0
        %994 = vmatpush1.xpose.msra.mxu0 0.0
        %995 = vmatprep.subr.mxu0 0.0
        %996 = vmatpush1.xpose.msra.mxu0 0.0
        %997 = vmatprep.subr.mxu0 0.0
        %998 = vmatpush1.xpose.msra.mxu0 0.0
        %999 = vmatprep.subr.mxu0 0.0
        %1000 = vmatpush1.xpose.msra.mxu0 0.0
        %1001 = vmatprep.subr.mxu0 0.0
        %1002 = vmatpush1.xpose.msra.mxu0 0.0
        %1003 = vmatprep.subr.mxu0 0.0
        %1004 = vmatpush1.xpose.msra.mxu0 0.0
        %1005 = vmatprep.subr.mxu0 0.0
        %1006 = vmatpush1.xpose.msra.mxu0 0.0
        %1007 = vmatprep.subr.mxu0 0.0
        %1008 = vmatpush1.xpose.msra.mxu0 0.0
        %1009 = vmatprep.subr.mxu0 0.0
        %1010 = vmatpush1.xpose.msra.mxu0 0.0
        %1011 = vmatprep.subr.mxu0 0.0
        %1012 = vmatpush1.xpose.msra.mxu0 0.0
        %1013 = vmatprep.subr.mxu0 0.0
        %1014 = vmatpush1.xpose.msra.mxu0 0.0
        %1015 = vmatprep.subr.mxu0 0.0
        %1016 = vmatpush1.xpose.msra.mxu0 0.0
        %1017 = vmatprep.subr.mxu0 0.0
        %1018 = vmatpush1.xpose.msra.mxu0 0.0
        %1019 = vmatprep.subr.mxu0 0.0
        %1020 = vmatpush1.xpose.msra.mxu0 0.0
        %1021 = vmatprep.subr.mxu0 0.0
        %1022 = vmatpush1.xpose.msra.mxu0 0.0
        %1023 = vmatprep.subr.mxu0 0.0
        %1024 = vmatpush1.xpose.msra.mxu0 0.0
        %1025 = vmatprep.subr.mxu0 0.0
        %1026 = vmatpush1.xpose.msra.mxu0 0.0
        %1027 = vmatprep.subr.mxu0 0.0
        %1028 = vmatpush1.xpose.msra.mxu0 0.0
        %1029 = vmatprep.subr.mxu0 0.0
        %1030 = vmatpush1.xpose.msra.mxu0 0.0
        %1031 = vmatprep.subr.mxu0 0.0
        %1032 = vmatpush1.xpose.msra.mxu0 0.0
        %1033 = vmatprep.subr.mxu0 0.0
        %1034 = vmatpush1.xpose.msra.mxu0 0.0
        %1035 = vmatprep.subr.mxu0 0.0
        %1036 = vmatpush1.xpose.msra.mxu0 0.0
        %1037 = vmatprep.subr.mxu0 0.0
        %1038 = vmatpush1.xpose.msra.mxu0 0.0
        %1039 = vmatprep.subr.mxu0 0.0
        %1040 = vmatpush1.xpose.msra.mxu0 0.0
        %1041 = vmatprep.subr.mxu0 0.0
        %1042 = vmatpush1.xpose.msra.mxu0 0.0
        %1043 = vmatprep.subr.mxu0 0.0
        %1044 = vmatpush1.xpose.msra.mxu0 0.0
        %1045 = vmatprep.subr.mxu0 0.0
        %1046 = vmatpush1.xpose.msra.mxu0 0.0
        %1047 = vmatprep.subr.mxu0 0.0
        %1048 = vmatpush1.xpose.msra.mxu0 0.0
        %1049 = vmatprep.mubr.f32.mxu0 0.0
        %1050 = vmatmul.mubr.f32.gmra.mrb[0].mxu0 %v935
        %v1051 = vpop.f32.mrb[0].mxu0
        %v1052 = vadd.f32 0.0, %v1051
        %v1053 = vpop.f32.mrb[0].mxu0
        %1054 = vmatprep.mubr.f32.mxu0 0.0
        %1055 = vmatmul.mubr.f32.gmra.mrb[0].mxu0 %v938
        %v1056 = vpop.f32.mrb[0].mxu0
        %v1057 = vadd.f32 0.0, %v1056
        %v1058 = vpop.f32.mrb[0].mxu0
        %1059 = vmatprep.mubr.f32.mxu0 0.0
        %1060 = vmatmul.mubr.f32.gmra.mrb[0].mxu0 %v941
        %v1061 = vpop.f32.mrb[0].mxu0
        %v1062 = vadd.f32 0.0, %v1061
        %v1063 = vpop.f32.mrb[0].mxu0
        %1064 = vmatprep.mubr.f32.mxu0 0.0
        %1065 = vmatmul.mubr.f32.gmra.mrb[0].mxu0 %v944
        %v1066 = vpop.f32.mrb[0].mxu0
        %v1067 = vadd.f32 0.0, %v1066
        %v1068 = vpop.f32.mrb[0].mxu0
        %1069 = vmatprep.mubr.f32.mxu0 0.0
        %1070 = vmatmul.mubr.f32.gmra.mrb[0].mxu0 %v947
        %v1071 = vpop.f32.mrb[0].mxu0
        %v1072 = vadd.f32 0.0, %v1071
        %v1073 = vpop.f32.mrb[0].mxu0
        %1074 = vmatprep.mubr.f32.mxu0 0.0
        %1075 = vmatmul.mubr.f32.gmra.mrb[0].mxu0 %v950
        %v1076 = vpop.f32.mrb[0].mxu0
        %v1077 = vadd.f32 0.0, %v1076
        %v1078 = vpop.f32.mrb[0].mxu0
        %1079 = vmatprep.mubr.f32.mxu0 0.0
        %1080 = vmatmul.mubr.f32.gmra.mrb[0].mxu0 %v953
        %v1081 = vpop.f32.mrb[0].mxu0
        %v1082 = vadd.f32 0.0, %v1081
        %v1083 = vpop.f32.mrb[0].mxu0
        %1084 = vmatprep.mubr.f32.mxu0 0.0
        %1085 = vmatmul.mubr.f32.gmra.mrb[0].mxu0 %v956
        %v1086 = vpop.f32.mrb[0].mxu0
        %v1087 = vadd.f32 0.0, %v1086
        %v1088 = vpop.f32.mrb[0].mxu0
        %1089 = vmatprep.mubr.f32.mxu0 0.0
        %1090 = vmatmul.mubr.f32.gmra.mrb[0].mxu0 %v959
        %v1091 = vpop.f32.mrb[0].mxu0
        %v1092 = vadd.f32 0.0, %v1091
        %v1093 = vpop.f32.mrb[0].mxu0
        %1094 = vmatprep.mubr.f32.mxu0 0.0
        %1095 = vmatmul.mubr.f32.gmra.mrb[0].mxu0 %v962
        %v1096 = vpop.f32.mrb[0].mxu0
        %v1097 = vadd.f32 0.0, %v1096
        %v1098 = vpop.f32.mrb[0].mxu0
        %1099 = vmatprep.mubr.f32.mxu0 0.0
        %1100 = vmatmul.mubr.f32.gmra.mrb[0].mxu0 %v965
        %v1101 = vpop.f32.mrb[0].mxu0
        %v1102 = vadd.f32 0.0, %v1101
        %v1103 = vpop.f32.mrb[0].mxu0
        %1104 = vmatprep.mubr.f32.mxu0 0.0
        %1105 = vmatmul.mubr.f32.gmra.mrb[0].mxu0 %v968
        %v1106 = vpop.f32.mrb[0].mxu0
        %v1107 = vadd.f32 0.0, %v1106
        %v1108 = vpop.f32.mrb[0].mxu0
        %1109 = vmatprep.mubr.f32.mxu0 0.0
        %1110 = vmatmul.mubr.f32.gmra.mrb[0].mxu0 %v971
        %v1111 = vpop.f32.mrb[0].mxu0
        %v1112 = vadd.f32 0.0, %v1111
        %v1113 = vpop.f32.mrb[0].mxu0
        %1114 = vmatprep.mubr.f32.mxu0 0.0
        %1115 = vmatmul.mubr.f32.gmra.mrb[0].mxu0 %v974
        %v1116 = vpop.f32.mrb[0].mxu0
        %v1117 = vadd.f32 0.0, %v1116
        %v1118 = vpop.f32.mrb[0].mxu0
        %1119 = vmatprep.mubr.f32.mxu0 0.0
        %1120 = vmatmul.mubr.f32.gmra.mrb[0].mxu0 %v977
        %v1121 = vpop.f32.mrb[0].mxu0
        %v1122 = vadd.f32 0.0, %v1121
        %v1123 = vpop.f32.mrb[0].mxu0
        %1124 = vmatprep.mubr.f32.mxu0 0.0
        %1125 = vmatmul.mubr.f32.gmra.mrb[0].mxu0 %v980
        %v1126 = vpop.f32.mrb[0].mxu0
        %v1127 = vadd.f32 0.0, %v1126
        %v1128 = vpop.f32.mrb[0].mxu0
        %1129 = vdwg.mxu0
        %vm1130 = vcmp.le.f32.partialorder %v547, 0.0
        %vm1131 = vcmp.le.f32.partialorder %v548, 0.0
        %vm1132 = vcmp.le.f32.partialorder %v549, 0.0
        %vm1133 = vcmp.le.f32.partialorder %v550, 0.0
        %vm1134 = vcmp.le.f32.partialorder %v551, 0.0
        %vm1135 = vcmp.le.f32.partialorder %v552, 0.0
        %vm1136 = vcmp.le.f32.partialorder %v553, 0.0
        %vm1137 = vcmp.le.f32.partialorder %v554, 0.0
        %vm1138 = vcmp.le.f32.partialorder %v555, 0.0
        %vm1139 = vcmp.le.f32.partialorder %v556, 0.0
        %vm1140 = vcmp.le.f32.partialorder %v557, 0.0
        %vm1141 = vcmp.le.f32.partialorder %v558, 0.0
        %vm1142 = vcmp.le.f32.partialorder %v559, 0.0
        %vm1143 = vcmp.le.f32.partialorder %v560, 0.0
        %vm1144 = vcmp.le.f32.partialorder %v561, 0.0
        %vm1145 = vcmp.le.f32.partialorder %v562, 0.0
        %v1146 = vpack.c.bf16 %v655, %v652
        %v1147 = vpack.c.bf16 %v663, %v660
        %v1148 = vpack.c.bf16 %v671, %v668
        %v1149 = vpack.c.bf16 %v679, %v676
        %v1150 = vpack.c.bf16 %v687, %v684
        %v1151 = vpack.c.bf16 %v695, %v692
        %v1152 = vpack.c.bf16 %v703, %v700
        %v1153 = vpack.c.bf16 %v711, %v708
        %v1154 = vlaneseq
        %v1155 = vand.u32 %v1154, 127
        %1157 = vset.pattern.permute.xlu0 0
        %1158 = vperm.xlu0 %1157, %v1052
        %v1159 = vpop.permute.xlu0 %1158
        %1162 = vset.pattern.permute.xlu0 0
        %1163 = vperm.xlu0 %1162, %v1057
        %v1164 = vpop.permute.xlu0 %1163
        %1167 = vset.pattern.permute.xlu0 0
        %1168 = vperm.xlu0 %1167, %v1062
        %v1169 = vpop.permute.xlu0 %1168
        %1172 = vset.pattern.permute.xlu0 0
        %1173 = vperm.xlu0 %1172, %v1067
        %v1174 = vpop.permute.xlu0 %1173
        %1177 = vset.pattern.permute.xlu0 0
        %1178 = vperm.xlu0 %1177, %v1072
        %v1179 = vpop.permute.xlu0 %1178
        %1182 = vset.pattern.permute.xlu0 0
        %1183 = vperm.xlu0 %1182, %v1077
        %v1184 = vpop.permute.xlu0 %1183
        %1187 = vset.pattern.permute.xlu0 0
        %1188 = vperm.xlu0 %1187, %v1082
        %v1189 = vpop.permute.xlu0 %1188
        %1192 = vset.pattern.permute.xlu0 0
        %1193 = vperm.xlu0 %1192, %v1087
        %v1194 = vpop.permute.xlu0 %1193
        %1197 = vset.pattern.permute.xlu0 0
        %1198 = vperm.xlu0 %1197, %v1092
        %v1199 = vpop.permute.xlu0 %1198
        %1202 = vset.pattern.permute.xlu0 0
        %1203 = vperm.xlu0 %1202, %v1097
        %v1204 = vpop.permute.xlu0 %1203
        %1207 = vset.pattern.permute.xlu0 0
        %1208 = vperm.xlu0 %1207, %v1102
        %v1209 = vpop.permute.xlu0 %1208
        %1212 = vset.pattern.permute.xlu0 0
        %1213 = vperm.xlu0 %1212, %v1107
        %v1214 = vpop.permute.xlu0 %1213
        %1217 = vset.pattern.permute.xlu0 0
        %1218 = vperm.xlu0 %1217, %v1112
        %v1219 = vpop.permute.xlu0 %1218
        %1222 = vset.pattern.permute.xlu0 0
        %1223 = vperm.xlu0 %1222, %v1117
        %v1224 = vpop.permute.xlu0 %1223
        %1227 = vset.pattern.permute.xlu0 0
        %1228 = vperm.xlu0 %1227, %v1122
        %v1229 = vpop.permute.xlu0 %1228
        %1232 = vset.pattern.permute.xlu0 0
        %1233 = vperm.xlu0 %1232, %v1127
        %v1234 = vpop.permute.xlu0 %1233
        %v1236 = vlaneseq
        %v1237 = vshrl.u32 %v1236, 7
        %v1238 = vsub.s32 0, %v1237
        %v1239 = vrot.slane %v931, %v1238
        %v1240 = vadd.f32 %v1159, %v1239
        %v1241 = vadd.f32 %v1164, %v1239
        %v1242 = vadd.f32 %v1169, %v1239
        %v1243 = vadd.f32 %v1174, %v1239
        %v1244 = vadd.f32 %v1179, %v1239
        %v1245 = vadd.f32 %v1184, %v1239
        %v1246 = vadd.f32 %v1189, %v1239
        %v1247 = vadd.f32 %v1194, %v1239
        %v1248 = vadd.f32 %v1199, %v1239
        %v1249 = vadd.f32 %v1204, %v1239
        %v1250 = vadd.f32 %v1209, %v1239
        %v1251 = vadd.f32 %v1214, %v1239
        %v1252 = vadd.f32 %v1219, %v1239
        %v1253 = vadd.f32 %v1224, %v1239
        %v1254 = vadd.f32 %v1229, %v1239
        %v1255 = vadd.f32 %v1234, %v1239
        %vm1256 = vcmp.ge.f32.partialorder %v1240, 0.0
        %vm1257 = vcmp.ge.f32.partialorder %v1241, 0.0
        %vm1258 = vcmp.ge.f32.partialorder %v1242, 0.0
        %vm1259 = vcmp.ge.f32.partialorder %v1243, 0.0
        %vm1260 = vcmp.ge.f32.partialorder %v1244, 0.0
        %vm1261 = vcmp.ge.f32.partialorder %v1245, 0.0
        %vm1262 = vcmp.ge.f32.partialorder %v1246, 0.0
        %vm1263 = vcmp.ge.f32.partialorder %v1247, 0.0
        %vm1264 = vcmp.ge.f32.partialorder %v1248, 0.0
        %vm1265 = vcmp.ge.f32.partialorder %v1249, 0.0
        %vm1266 = vcmp.ge.f32.partialorder %v1250, 0.0
        %vm1267 = vcmp.ge.f32.partialorder %v1251, 0.0
        %vm1268 = vcmp.ge.f32.partialorder %v1252, 0.0
        %vm1269 = vcmp.ge.f32.partialorder %v1253, 0.0
        %vm1270 = vcmp.ge.f32.partialorder %v1254, 0.0
        %vm1271 = vcmp.ge.f32.partialorder %v1255, 0.0
        %v1272 = vmul.f32 %v1240, 0.1
        %v1273 = vmul.f32 %v1241, 0.1
        %v1274 = vmul.f32 %v1242, 0.1
        %v1275 = vmul.f32 %v1243, 0.1
        %v1276 = vmul.f32 %v1244, 0.1
        %v1277 = vmul.f32 %v1245, 0.1
        %v1278 = vmul.f32 %v1246, 0.1
        %v1279 = vmul.f32 %v1247, 0.1
        %v1280 = vmul.f32 %v1248, 0.1
        %v1281 = vmul.f32 %v1249, 0.1
        %v1282 = vmul.f32 %v1250, 0.1
        %v1283 = vmul.f32 %v1251, 0.1
        %v1284 = vmul.f32 %v1252, 0.1
        %v1285 = vmul.f32 %v1253, 0.1
        %v1286 = vmul.f32 %v1254, 0.1
        %v1287 = vmul.f32 %v1255, 0.1
        %v1288 = vsel %vm1256, %v1240, %v1272
        %v1289 = vsel %vm1257, %v1241, %v1273
        %v1290 = vsel %vm1258, %v1242, %v1274
        %v1291 = vsel %vm1259, %v1243, %v1275
        %v1292 = vsel %vm1260, %v1244, %v1276
        %v1293 = vsel %vm1261, %v1245, %v1277
        %v1294 = vsel %vm1262, %v1246, %v1278
        %v1295 = vsel %vm1263, %v1247, %v1279
        %v1296 = vsel %vm1264, %v1248, %v1280
        %v1297 = vsel %vm1265, %v1249, %v1281
        %v1298 = vsel %vm1266, %v1250, %v1282
        %v1299 = vsel %vm1267, %v1251, %v1283
        %v1300 = vsel %vm1268, %v1252, %v1284
        %v1301 = vsel %vm1269, %v1253, %v1285
        %v1302 = vsel %vm1270, %v1254, %v1286
        %v1303 = vsel %vm1271, %v1255, %v1287
        %v1304 = vsel %vm1130, -1e+09, %v1288
        %v1305 = vsel %vm1131, -1e+09, %v1289
        %v1306 = vsel %vm1132, -1e+09, %v1290
        %v1307 = vsel %vm1133, -1e+09, %v1291
        %v1308 = vsel %vm1134, -1e+09, %v1292
        %v1309 = vsel %vm1135, -1e+09, %v1293
        %v1310 = vsel %vm1136, -1e+09, %v1294
        %v1311 = vsel %vm1137, -1e+09, %v1295
        %v1312 = vsel %vm1138, -1e+09, %v1296
        %v1313 = vsel %vm1139, -1e+09, %v1297
        %v1314 = vsel %vm1140, -1e+09, %v1298
        %v1315 = vsel %vm1141, -1e+09, %v1299
        %v1316 = vsel %vm1142, -1e+09, %v1300
        %v1317 = vsel %vm1143, -1e+09, %v1301
        %v1318 = vsel %vm1144, -1e+09, %v1302
        %v1319 = vsel %vm1145, -1e+09, %v1303
        %1320 = vmax.xlane.f32.xlu0 %v1304
        %v1321 = vpop.xlane.xlu0 %1320
        %1322 = vmax.xlane.f32.xlu0 %v1305
        %v1323 = vpop.xlane.xlu0 %1322
        %1324 = vmax.xlane.f32.xlu0 %v1306
        %v1325 = vpop.xlane.xlu0 %1324
        %1326 = vmax.xlane.f32.xlu0 %v1307
        %v1327 = vpop.xlane.xlu0 %1326
        %1328 = vmax.xlane.f32.xlu0 %v1308
        %v1329 = vpop.xlane.xlu0 %1328
        %1330 = vmax.xlane.f32.xlu0 %v1309
        %v1331 = vpop.xlane.xlu0 %1330
        %1332 = vmax.xlane.f32.xlu0 %v1310
        %v1333 = vpop.xlane.xlu0 %1332
        %1334 = vmax.xlane.f32.xlu0 %v1311
        %v1335 = vpop.xlane.xlu0 %1334
        %1336 = vmax.xlane.f32.xlu0 %v1312
        %v1337 = vpop.xlane.xlu0 %1336
        %1338 = vmax.xlane.f32.xlu0 %v1313
        %v1339 = vpop.xlane.xlu0 %1338
        %1340 = vmax.xlane.f32.xlu0 %v1314
        %v1341 = vpop.xlane.xlu0 %1340
        %1342 = vmax.xlane.f32.xlu0 %v1315
        %v1343 = vpop.xlane.xlu0 %1342
        %1344 = vmax.xlane.f32.xlu0 %v1316
        %v1345 = vpop.xlane.xlu0 %1344
        %1346 = vmax.xlane.f32.xlu0 %v1317
        %v1347 = vpop.xlane.xlu0 %1346
        %1348 = vmax.xlane.f32.xlu0 %v1318
        %v1349 = vpop.xlane.xlu0 %1348
        %1350 = vmax.xlane.f32.xlu0 %v1319
        %v1351 = vpop.xlane.xlu0 %1350
        %v1352 = vsub.f32 %v1304, %v1321
        %v1353 = vsub.f32 %v1305, %v1323
        %v1354 = vsub.f32 %v1306, %v1325
        %v1355 = vsub.f32 %v1307, %v1327
        %v1356 = vsub.f32 %v1308, %v1329
        %v1357 = vsub.f32 %v1309, %v1331
        %v1358 = vsub.f32 %v1310, %v1333
        %v1359 = vsub.f32 %v1311, %v1335
        %v1360 = vsub.f32 %v1312, %v1337
        %v1361 = vsub.f32 %v1313, %v1339
        %v1362 = vsub.f32 %v1314, %v1341
        %v1363 = vsub.f32 %v1315, %v1343
        %v1364 = vsub.f32 %v1316, %v1345
        %v1365 = vsub.f32 %v1317, %v1347
        %v1366 = vsub.f32 %v1318, %v1349
        %v1367 = vsub.f32 %v1319, %v1351
        %v1368 = vmul.f32 %v1352, 1.442695
        %v1369 = vpow.pop %v1368
        %v1370 = vmul.f32 %v1353, 1.442695
        %v1371 = vpow.pop %v1370
        %v1372 = vmul.f32 %v1354, 1.442695
        %v1373 = vpow.pop %v1372
        %v1374 = vmul.f32 %v1355, 1.442695
        %v1375 = vpow.pop %v1374
        %v1376 = vmul.f32 %v1356, 1.442695
        %v1377 = vpow.pop %v1376
        %v1378 = vmul.f32 %v1357, 1.442695
        %v1379 = vpow.pop %v1378
        %v1380 = vmul.f32 %v1358, 1.442695
        %v1381 = vpow.pop %v1380
        %v1382 = vmul.f32 %v1359, 1.442695
        %v1383 = vpow.pop %v1382
        %v1384 = vmul.f32 %v1360, 1.442695
        %v1385 = vpow.pop %v1384
        %v1386 = vmul.f32 %v1361, 1.442695
        %v1387 = vpow.pop %v1386
        %v1388 = vmul.f32 %v1362, 1.442695
        %v1389 = vpow.pop %v1388
        %v1390 = vmul.f32 %v1363, 1.442695
        %v1391 = vpow.pop %v1390
        %v1392 = vmul.f32 %v1364, 1.442695
        %v1393 = vpow.pop %v1392
        %v1394 = vmul.f32 %v1365, 1.442695
        %v1395 = vpow.pop %v1394
        %v1396 = vmul.f32 %v1366, 1.442695
        %v1397 = vpow.pop %v1396
        %v1398 = vmul.f32 %v1367, 1.442695
        %v1399 = vpow.pop %v1398
        %1400 = vadd.xlane.f32.xlu0 %v1369
        %v1401 = vpop.xlane.xlu0 %1400
        %1402 = vadd.xlane.f32.xlu0 %v1371
        %v1403 = vpop.xlane.xlu0 %1402
        %1404 = vadd.xlane.f32.xlu0 %v1373
        %v1405 = vpop.xlane.xlu0 %1404
        %1406 = vadd.xlane.f32.xlu0 %v1375
        %v1407 = vpop.xlane.xlu0 %1406
        %1408 = vadd.xlane.f32.xlu0 %v1377
        %v1409 = vpop.xlane.xlu0 %1408
        %1410 = vadd.xlane.f32.xlu0 %v1379
        %v1411 = vpop.xlane.xlu0 %1410
        %1412 = vadd.xlane.f32.xlu0 %v1381
        %v1413 = vpop.xlane.xlu0 %1412
        %1414 = vadd.xlane.f32.xlu0 %v1383
        %v1415 = vpop.xlane.xlu0 %1414
        %1416 = vadd.xlane.f32.xlu0 %v1385
        %v1417 = vpop.xlane.xlu0 %1416
        %1418 = vadd.xlane.f32.xlu0 %v1387
        %v1419 = vpop.xlane.xlu0 %1418
        %1420 = vadd.xlane.f32.xlu0 %v1389
        %v1421 = vpop.xlane.xlu0 %1420
        %1422 = vadd.xlane.f32.xlu0 %v1391
        %v1423 = vpop.xlane.xlu0 %1422
        %1424 = vadd.xlane.f32.xlu0 %v1393
        %v1425 = vpop.xlane.xlu0 %1424
        %1426 = vadd.xlane.f32.xlu0 %v1395
        %v1427 = vpop.xlane.xlu0 %1426
        %1428 = vadd.xlane.f32.xlu0 %v1397
        %v1429 = vpop.xlane.xlu0 %1428
        %1430 = vadd.xlane.f32.xlu0 %v1399
        %v1431 = vpop.xlane.xlu0 %1430
        %v1432 = vrcp.pop %v1401
        %v1433 = vrcp.pop %v1403
        %v1434 = vrcp.pop %v1405
        %v1435 = vrcp.pop %v1407
        %v1436 = vrcp.pop %v1409
        %v1437 = vrcp.pop %v1411
        %v1438 = vrcp.pop %v1413
        %v1439 = vrcp.pop %v1415
        %v1440 = vrcp.pop %v1417
        %v1441 = vrcp.pop %v1419
        %v1442 = vrcp.pop %v1421
        %v1443 = vrcp.pop %v1423
        %v1444 = vrcp.pop %v1425
        %v1445 = vrcp.pop %v1427
        %v1446 = vrcp.pop %v1429
        %v1447 = vrcp.pop %v1431
        %v1448 = vmul.f32 %v1369, %v547
        %v1449 = vmul.f32 %v1371, %v548
        %v1450 = vmul.f32 %v1373, %v549
        %v1451 = vmul.f32 %v1375, %v550
        %v1452 = vmul.f32 %v1377, %v551
        %v1453 = vmul.f32 %v1379, %v552
        %v1454 = vmul.f32 %v1381, %v553
        %v1455 = vmul.f32 %v1383, %v554
        %v1456 = vmul.f32 %v1385, %v555
        %v1457 = vmul.f32 %v1387, %v556
        %v1458 = vmul.f32 %v1389, %v557
        %v1459 = vmul.f32 %v1391, %v558
        %v1460 = vmul.f32 %v1393, %v559
        %v1461 = vmul.f32 %v1395, %v560
        %v1462 = vmul.f32 %v1397, %v561
        %v1463 = vmul.f32 %v1399, %v562
        %v1464 = vpack.c.bf16 %v1449, %v1448
        %v1465 = vpack.c.bf16 %v1451, %v1450
        %v1466 = vpack.c.bf16 %v1453, %v1452
        %v1467 = vpack.c.bf16 %v1455, %v1454
        %v1468 = vpack.c.bf16 %v1457, %v1456
        %v1469 = vpack.c.bf16 %v1459, %v1458
        %v1470 = vpack.c.bf16 %v1461, %v1460
        %v1471 = vpack.c.bf16 %v1463, %v1462
        %vm1472 = vcmp.ge.s32.totalorder %v1155, 0
        %vm1473 = vcmp.lt.s32.totalorder %v1155, 16
        %vm1474 = vmand %vm1472, %vm1473
        %v1475 = vsel %vm1474, 1, 0
        %vm1476 = vcmp.eq.s32.totalorder %v1475, 1
        %vm1477 = vmpackc.low %vm1476, %vm1476
        %v1478 = vsel %vm1477, 65537, 0
        %v1479 = vlaneseq
        %v1480 = vshrl.u32 %v1479, 7
        %v1481 = vsub.s32 0, %v1480
        %v1482 = vrot.slane %v1478, %v1481
        %vm1483 = vcmp.ne.s16.totalorder %v1482, 0
        %v1484 = vsel %vm1483, %v1146, 0
        %v1485 = vsel %vm1483, %v1147, 0
        %v1486 = vsel %vm1483, %v1148, 0
        %v1487 = vsel %vm1483, %v1149, 0
        %v1488 = vsel %vm1483, %v1150, 0
        %v1489 = vsel %vm1483, %v1151, 0
        %v1490 = vsel %vm1483, %v1152, 0
        %v1491 = vsel %vm1483, %v1153, 0
        %1492 = vmatprep.subr.bf16.mxu0 0
        %1493 = vmatpush1.bf16.msra.mxu0 %v1484
        %1494 = vmatprep.subr.bf16.mxu0 0
        %1495 = vmatpush1.bf16.msra.mxu0 %v1485
        %1496 = vmatprep.subr.bf16.mxu0 0
        %1497 = vmatpush1.bf16.msra.mxu0 %v1486
        %1498 = vmatprep.subr.bf16.mxu0 0
        %1499 = vmatpush1.bf16.msra.mxu0 %v1487
        %1500 = vmatprep.subr.bf16.mxu0 0
        %1501 = vmatpush1.bf16.msra.mxu0 %v1488
        %1502 = vmatprep.subr.bf16.mxu0 0
        %1503 = vmatpush1.bf16.msra.mxu0 %v1489
        %1504 = vmatprep.subr.bf16.mxu0 0
        %1505 = vmatpush1.bf16.msra.mxu0 %v1490
        %1506 = vmatprep.subr.bf16.mxu0 0
        %1507 = vmatpush1.bf16.msra.mxu0 %v1491
        %1508 = vmatprep.subr.bf16.mxu0 0
        %1509 = vmatpush1.bf16.msra.mxu0 0
        %1510 = vmatprep.subr.bf16.mxu0 0
        %1511 = vmatpush1.bf16.msra.mxu0 0
        %1512 = vmatprep.subr.bf16.mxu0 0
        %1513 = vmatpush1.bf16.msra.mxu0 0
        %1514 = vmatprep.subr.bf16.mxu0 0
        %1515 = vmatpush1.bf16.msra.mxu0 0
        %1516 = vmatprep.subr.bf16.mxu0 0
        %1517 = vmatpush1.bf16.msra.mxu0 0
        %1518 = vmatprep.subr.bf16.mxu0 0
        %1519 = vmatpush1.bf16.msra.mxu0 0
        %1520 = vmatprep.subr.bf16.mxu0 0
        %1521 = vmatpush1.bf16.msra.mxu0 0
        %1522 = vmatprep.subr.bf16.mxu0 0
        %1523 = vmatpush1.bf16.msra.mxu0 0
        %1524 = vmatprep.mubr.bf16.mxu0 0
        %1525 = vmatmul.mubr.bf16.gmra.mrb[0].mxu0 %v1464
        %v1526 = vpop.f32.mrb[0].mxu0
        %v1527 = vadd.f32 0.0, %v1526
        %v1528 = vpop.f32.mrb[0].mxu0
        %v1529 = vpop.f32.mrb[0].mxu0
        %v1530 = vadd.f32 0.0, %v1529
        %v1531 = vpop.f32.mrb[0].mxu0
        %1532 = vmatprep.mubr.bf16.mxu0 0
        %1533 = vmatmul.mubr.bf16.gmra.mrb[0].mxu0 %v1465
        %v1534 = vpop.f32.mrb[0].mxu0
        %v1535 = vadd.f32 0.0, %v1534
        %v1536 = vpop.f32.mrb[0].mxu0
        %v1537 = vpop.f32.mrb[0].mxu0
        %v1538 = vadd.f32 0.0, %v1537
        %v1539 = vpop.f32.mrb[0].mxu0
        %1540 = vmatprep.mubr.bf16.mxu0 0
        %1541 = vmatmul.mubr.bf16.gmra.mrb[0].mxu0 %v1466
        %v1542 = vpop.f32.mrb[0].mxu0
        %v1543 = vadd.f32 0.0, %v1542
        %v1544 = vpop.f32.mrb[0].mxu0
        %v1545 = vpop.f32.mrb[0].mxu0
        %v1546 = vadd.f32 0.0, %v1545
        %v1547 = vpop.f32.mrb[0].mxu0
        %1548 = vmatprep.mubr.bf16.mxu0 0
        %1549 = vmatmul.mubr.bf16.gmra.mrb[0].mxu0 %v1467
        %v1550 = vpop.f32.mrb[0].mxu0
        %v1551 = vadd.f32 0.0, %v1550
        %v1552 = vpop.f32.mrb[0].mxu0
        %v1553 = vpop.f32.mrb[0].mxu0
        %v1554 = vadd.f32 0.0, %v1553
        %v1555 = vpop.f32.mrb[0].mxu0
        %1556 = vmatprep.mubr.bf16.mxu0 0
        %1557 = vmatmul.mubr.bf16.gmra.mrb[0].mxu0 %v1468
        %v1558 = vpop.f32.mrb[0].mxu0
        %v1559 = vadd.f32 0.0, %v1558
        %v1560 = vpop.f32.mrb[0].mxu0
        %v1561 = vpop.f32.mrb[0].mxu0
        %v1562 = vadd.f32 0.0, %v1561
        %v1563 = vpop.f32.mrb[0].mxu0
        %1564 = vmatprep.mubr.bf16.mxu0 0
        %1565 = vmatmul.mubr.bf16.gmra.mrb[0].mxu0 %v1469
        %v1566 = vpop.f32.mrb[0].mxu0
        %v1567 = vadd.f32 0.0, %v1566
        %v1568 = vpop.f32.mrb[0].mxu0
        %v1569 = vpop.f32.mrb[0].mxu0
        %v1570 = vadd.f32 0.0, %v1569
        %v1571 = vpop.f32.mrb[0].mxu0
        %1572 = vmatprep.mubr.bf16.mxu0 0
        %1573 = vmatmul.mubr.bf16.gmra.mrb[0].mxu0 %v1470
        %v1574 = vpop.f32.mrb[0].mxu0
        %v1575 = vadd.f32 0.0, %v1574
        %v1576 = vpop.f32.mrb[0].mxu0
        %v1577 = vpop.f32.mrb[0].mxu0
        %v1578 = vadd.f32 0.0, %v1577
        %v1579 = vpop.f32.mrb[0].mxu0
        %1580 = vmatprep.mubr.bf16.mxu0 0
        %1581 = vmatmul.mubr.bf16.gmra.mrb[0].mxu0 %v1471
        %v1582 = vpop.f32.mrb[0].mxu0
        %v1583 = vadd.f32 0.0, %v1582
        %v1584 = vpop.f32.mrb[0].mxu0
        %v1585 = vpop.f32.mrb[0].mxu0
        %v1586 = vadd.f32 0.0, %v1585
        %v1587 = vpop.f32.mrb[0].mxu0
        %1588 = vdwg.mxu0
        %v1589 = vmul.f32 %v1432, %v1527
        %v1590 = vmul.f32 %v1433, %v1530
        %v1591 = vmul.f32 %v1434, %v1535
        %v1592 = vmul.f32 %v1435, %v1538
        %v1593 = vmul.f32 %v1436, %v1543
        %v1594 = vmul.f32 %v1437, %v1546
        %v1595 = vmul.f32 %v1438, %v1551
        %v1596 = vmul.f32 %v1439, %v1554
        %v1597 = vmul.f32 %v1440, %v1559
        %v1598 = vmul.f32 %v1441, %v1562
        %v1599 = vmul.f32 %v1442, %v1567
        %v1600 = vmul.f32 %v1443, %v1570
        %v1601 = vmul.f32 %v1444, %v1575
        %v1602 = vmul.f32 %v1445, %v1578
        %v1603 = vmul.f32 %v1446, %v1583
        %v1604 = vmul.f32 %v1447, %v1586
        %v1605 = vadd.f32 %v1589, 0.0
        %v1606 = vadd.f32 %v1590, 0.0
        %v1607 = vadd.f32 %v1591, 0.0
        %v1608 = vadd.f32 %v1592, 0.0
        %v1609 = vadd.f32 %v1593, 0.0
        %v1610 = vadd.f32 %v1594, 0.0
        %v1611 = vadd.f32 %v1595, 0.0
        %v1612 = vadd.f32 %v1596, 0.0
        %v1613 = vadd.f32 %v1597, 0.0
        %v1614 = vadd.f32 %v1598, 0.0
        %v1615 = vadd.f32 %v1599, 0.0
        %v1616 = vadd.f32 %v1600, 0.0
        %v1617 = vadd.f32 %v1601, 0.0
        %v1618 = vadd.f32 %v1602, 0.0
        %v1619 = vadd.f32 %v1603, 0.0
        %v1620 = vadd.f32 %v1604, 0.0
        %1621 = vset.pattern.permute.xlu0 1
        %1622 = vperm.xlu0 %1621, %v1052
        %v1623 = vpop.permute.xlu0 %1622
        %1625 = vset.pattern.permute.xlu0 1
        %1626 = vperm.xlu0 %1625, %v1057
        %v1627 = vpop.permute.xlu0 %1626
        %1629 = vset.pattern.permute.xlu0 1
        %1630 = vperm.xlu0 %1629, %v1062
        %v1631 = vpop.permute.xlu0 %1630
        %1633 = vset.pattern.permute.xlu0 1
        %1634 = vperm.xlu0 %1633, %v1067
        %v1635 = vpop.permute.xlu0 %1634
        %1637 = vset.pattern.permute.xlu0 1
        %1638 = vperm.xlu0 %1637, %v1072
        %v1639 = vpop.permute.xlu0 %1638
        %1641 = vset.pattern.permute.xlu0 1
        %1642 = vperm.xlu0 %1641, %v1077
        %v1643 = vpop.permute.xlu0 %1642
        %1645 = vset.pattern.permute.xlu0 1
        %1646 = vperm.xlu0 %1645, %v1082
        %v1647 = vpop.permute.xlu0 %1646
        %1649 = vset.pattern.permute.xlu0 1
        %1650 = vperm.xlu0 %1649, %v1087
        %v1651 = vpop.permute.xlu0 %1650
        %1653 = vset.pattern.permute.xlu0 1
        %1654 = vperm.xlu0 %1653, %v1092
        %v1655 = vpop.permute.xlu0 %1654
        %1657 = vset.pattern.permute.xlu0 1
        %1658 = vperm.xlu0 %1657, %v1097
        %v1659 = vpop.permute.xlu0 %1658
        %1661 = vset.pattern.permute.xlu0 1
        %1662 = vperm.xlu0 %1661, %v1102
        %v1663 = vpop.permute.xlu0 %1662
        %1665 = vset.pattern.permute.xlu0 1
        %1666 = vperm.xlu0 %1665, %v1107
        %v1667 = vpop.permute.xlu0 %1666
        %1669 = vset.pattern.permute.xlu0 1
        %1670 = vperm.xlu0 %1669, %v1112
        %v1671 = vpop.permute.xlu0 %1670
        %1673 = vset.pattern.permute.xlu0 1
        %1674 = vperm.xlu0 %1673, %v1117
        %v1675 = vpop.permute.xlu0 %1674
        %1677 = vset.pattern.permute.xlu0 1
        %1678 = vperm.xlu0 %1677, %v1122
        %v1679 = vpop.permute.xlu0 %1678
        %1681 = vset.pattern.permute.xlu0 1
        %1682 = vperm.xlu0 %1681, %v1127
        %v1683 = vpop.permute.xlu0 %1682
        %v1685 = vlaneseq
        %v1686 = vshrl.u32 %v1685, 7
        %v1687 = vsub.s32 1, %v1686
        %v1688 = vrot.slane %v931, %v1687
        %v1689 = vadd.f32 %v1623, %v1688
        %v1690 = vadd.f32 %v1627, %v1688
        %v1691 = vadd.f32 %v1631, %v1688
        %v1692 = vadd.f32 %v1635, %v1688
        %v1693 = vadd.f32 %v1639, %v1688
        %v1694 = vadd.f32 %v1643, %v1688
        %v1695 = vadd.f32 %v1647, %v1688
        %v1696 = vadd.f32 %v1651, %v1688
        %v1697 = vadd.f32 %v1655, %v1688
        %v1698 = vadd.f32 %v1659, %v1688
        %v1699 = vadd.f32 %v1663, %v1688
        %v1700 = vadd.f32 %v1667, %v1688
        %v1701 = vadd.f32 %v1671, %v1688
        %v1702 = vadd.f32 %v1675, %v1688
        %v1703 = vadd.f32 %v1679, %v1688
        %v1704 = vadd.f32 %v1683, %v1688
        %vm1705 = vcmp.ge.f32.partialorder %v1689, 0.0
        %vm1706 = vcmp.ge.f32.partialorder %v1690, 0.0
        %vm1707 = vcmp.ge.f32.partialorder %v1691, 0.0
        %vm1708 = vcmp.ge.f32.partialorder %v1692, 0.0
        %vm1709 = vcmp.ge.f32.partialorder %v1693, 0.0
        %vm1710 = vcmp.ge.f32.partialorder %v1694, 0.0
        %vm1711 = vcmp.ge.f32.partialorder %v1695, 0.0
        %vm1712 = vcmp.ge.f32.partialorder %v1696, 0.0
        %vm1713 = vcmp.ge.f32.partialorder %v1697, 0.0
        %vm1714 = vcmp.ge.f32.partialorder %v1698, 0.0
        %vm1715 = vcmp.ge.f32.partialorder %v1699, 0.0
        %vm1716 = vcmp.ge.f32.partialorder %v1700, 0.0
        %vm1717 = vcmp.ge.f32.partialorder %v1701, 0.0
        %vm1718 = vcmp.ge.f32.partialorder %v1702, 0.0
        %vm1719 = vcmp.ge.f32.partialorder %v1703, 0.0
        %vm1720 = vcmp.ge.f32.partialorder %v1704, 0.0
        %v1721 = vmul.f32 %v1689, 0.1
        %v1722 = vmul.f32 %v1690, 0.1
        %v1723 = vmul.f32 %v1691, 0.1
        %v1724 = vmul.f32 %v1692, 0.1
        %v1725 = vmul.f32 %v1693, 0.1
        %v1726 = vmul.f32 %v1694, 0.1
        %v1727 = vmul.f32 %v1695, 0.1
        %v1728 = vmul.f32 %v1696, 0.1
        %v1729 = vmul.f32 %v1697, 0.1
        %v1730 = vmul.f32 %v1698, 0.1
        %v1731 = vmul.f32 %v1699, 0.1
        %v1732 = vmul.f32 %v1700, 0.1
        %v1733 = vmul.f32 %v1701, 0.1
        %v1734 = vmul.f32 %v1702, 0.1
        %v1735 = vmul.f32 %v1703, 0.1
        %v1736 = vmul.f32 %v1704, 0.1
        %v1737 = vsel %vm1705, %v1689, %v1721
        %v1738 = vsel %vm1706, %v1690, %v1722
        %v1739 = vsel %vm1707, %v1691, %v1723
        %v1740 = vsel %vm1708, %v1692, %v1724
        %v1741 = vsel %vm1709, %v1693, %v1725
        %v1742 = vsel %vm1710, %v1694, %v1726
        %v1743 = vsel %vm1711, %v1695, %v1727
        %v1744 = vsel %vm1712, %v1696, %v1728
        %v1745 = vsel %vm1713, %v1697, %v1729
        %v1746 = vsel %vm1714, %v1698, %v1730
        %v1747 = vsel %vm1715, %v1699, %v1731
        %v1748 = vsel %vm1716, %v1700, %v1732
        %v1749 = vsel %vm1717, %v1701, %v1733
        %v1750 = vsel %vm1718, %v1702, %v1734
        %v1751 = vsel %vm1719, %v1703, %v1735
        %v1752 = vsel %vm1720, %v1704, %v1736
        %v1753 = vsel %vm1130, -1e+09, %v1737
        %v1754 = vsel %vm1131, -1e+09, %v1738
        %v1755 = vsel %vm1132, -1e+09, %v1739
        %v1756 = vsel %vm1133, -1e+09, %v1740
        %v1757 = vsel %vm1134, -1e+09, %v1741
        %v1758 = vsel %vm1135, -1e+09, %v1742
        %v1759 = vsel %vm1136, -1e+09, %v1743
        %v1760 = vsel %vm1137, -1e+09, %v1744
        %v1761 = vsel %vm1138, -1e+09, %v1745
        %v1762 = vsel %vm1139, -1e+09, %v1746
        %v1763 = vsel %vm1140, -1e+09, %v1747
        %v1764 = vsel %vm1141, -1e+09, %v1748
        %v1765 = vsel %vm1142, -1e+09, %v1749
        %v1766 = vsel %vm1143, -1e+09, %v1750
        %v1767 = vsel %vm1144, -1e+09, %v1751
        %v1768 = vsel %vm1145, -1e+09, %v1752
        %1769 = vmax.xlane.f32.xlu0 %v1753
        %v1770 = vpop.xlane.xlu0 %1769
        %1771 = vmax.xlane.f32.xlu0 %v1754
        %v1772 = vpop.xlane.xlu0 %1771
        %1773 = vmax.xlane.f32.xlu0 %v1755
        %v1774 = vpop.xlane.xlu0 %1773
        %1775 = vmax.xlane.f32.xlu0 %v1756
        %v1776 = vpop.xlane.xlu0 %1775
        %1777 = vmax.xlane.f32.xlu0 %v1757
        %v1778 = vpop.xlane.xlu0 %1777
        %1779 = vmax.xlane.f32.xlu0 %v1758
        %v1780 = vpop.xlane.xlu0 %1779
        %1781 = vmax.xlane.f32.xlu0 %v1759
        %v1782 = vpop.xlane.xlu0 %1781
        %1783 = vmax.xlane.f32.xlu0 %v1760
        %v1784 = vpop.xlane.xlu0 %1783
        %1785 = vmax.xlane.f32.xlu0 %v1761
        %v1786 = vpop.xlane.xlu0 %1785
        %1787 = vmax.xlane.f32.xlu0 %v1762
        %v1788 = vpop.xlane.xlu0 %1787
        %1789 = vmax.xlane.f32.xlu0 %v1763
        %v1790 = vpop.xlane.xlu0 %1789
        %1791 = vmax.xlane.f32.xlu0 %v1764
        %v1792 = vpop.xlane.xlu0 %1791
        %1793 = vmax.xlane.f32.xlu0 %v1765
        %v1794 = vpop.xlane.xlu0 %1793
        %1795 = vmax.xlane.f32.xlu0 %v1766
        %v1796 = vpop.xlane.xlu0 %1795
        %1797 = vmax.xlane.f32.xlu0 %v1767
        %v1798 = vpop.xlane.xlu0 %1797
        %1799 = vmax.xlane.f32.xlu0 %v1768
        %v1800 = vpop.xlane.xlu0 %1799
        %v1801 = vsub.f32 %v1753, %v1770
        %v1802 = vsub.f32 %v1754, %v1772
        %v1803 = vsub.f32 %v1755, %v1774
        %v1804 = vsub.f32 %v1756, %v1776
        %v1805 = vsub.f32 %v1757, %v1778
        %v1806 = vsub.f32 %v1758, %v1780
        %v1807 = vsub.f32 %v1759, %v1782
        %v1808 = vsub.f32 %v1760, %v1784
        %v1809 = vsub.f32 %v1761, %v1786
        %v1810 = vsub.f32 %v1762, %v1788
        %v1811 = vsub.f32 %v1763, %v1790
        %v1812 = vsub.f32 %v1764, %v1792
        %v1813 = vsub.f32 %v1765, %v1794
        %v1814 = vsub.f32 %v1766, %v1796
        %v1815 = vsub.f32 %v1767, %v1798
        %v1816 = vsub.f32 %v1768, %v1800
        %v1817 = vmul.f32 %v1801, 1.442695
        %v1818 = vpow.pop %v1817
        %v1819 = vmul.f32 %v1802, 1.442695
        %v1820 = vpow.pop %v1819
        %v1821 = vmul.f32 %v1803, 1.442695
        %v1822 = vpow.pop %v1821
        %v1823 = vmul.f32 %v1804, 1.442695
        %v1824 = vpow.pop %v1823
        %v1825 = vmul.f32 %v1805, 1.442695
        %v1826 = vpow.pop %v1825
        %v1827 = vmul.f32 %v1806, 1.442695
        %v1828 = vpow.pop %v1827
        %v1829 = vmul.f32 %v1807, 1.442695
        %v1830 = vpow.pop %v1829
        %v1831 = vmul.f32 %v1808, 1.442695
        %v1832 = vpow.pop %v1831
        %v1833 = vmul.f32 %v1809, 1.442695
        %v1834 = vpow.pop %v1833
        %v1835 = vmul.f32 %v1810, 1.442695
        %v1836 = vpow.pop %v1835
        %v1837 = vmul.f32 %v1811, 1.442695
        %v1838 = vpow.pop %v1837
        %v1839 = vmul.f32 %v1812, 1.442695
        %v1840 = vpow.pop %v1839
        %v1841 = vmul.f32 %v1813, 1.442695
        %v1842 = vpow.pop %v1841
        %v1843 = vmul.f32 %v1814, 1.442695
        %v1844 = vpow.pop %v1843
        %v1845 = vmul.f32 %v1815, 1.442695
        %v1846 = vpow.pop %v1845
        %v1847 = vmul.f32 %v1816, 1.442695
        %v1848 = vpow.pop %v1847
        %1849 = vadd.xlane.f32.xlu0 %v1818
        %v1850 = vpop.xlane.xlu0 %1849
        %1851 = vadd.xlane.f32.xlu0 %v1820
        %v1852 = vpop.xlane.xlu0 %1851
        %1853 = vadd.xlane.f32.xlu0 %v1822
        %v1854 = vpop.xlane.xlu0 %1853
        %1855 = vadd.xlane.f32.xlu0 %v1824
        %v1856 = vpop.xlane.xlu0 %1855
        %1857 = vadd.xlane.f32.xlu0 %v1826
        %v1858 = vpop.xlane.xlu0 %1857
        %1859 = vadd.xlane.f32.xlu0 %v1828
        %v1860 = vpop.xlane.xlu0 %1859
        %1861 = vadd.xlane.f32.xlu0 %v1830
        %v1862 = vpop.xlane.xlu0 %1861
        %1863 = vadd.xlane.f32.xlu0 %v1832
        %v1864 = vpop.xlane.xlu0 %1863
        %1865 = vadd.xlane.f32.xlu0 %v1834
        %v1866 = vpop.xlane.xlu0 %1865
        %1867 = vadd.xlane.f32.xlu0 %v1836
        %v1868 = vpop.xlane.xlu0 %1867
        %1869 = vadd.xlane.f32.xlu0 %v1838
        %v1870 = vpop.xlane.xlu0 %1869
        %1871 = vadd.xlane.f32.xlu0 %v1840
        %v1872 = vpop.xlane.xlu0 %1871
        %1873 = vadd.xlane.f32.xlu0 %v1842
        %v1874 = vpop.xlane.xlu0 %1873
        %1875 = vadd.xlane.f32.xlu0 %v1844
        %v1876 = vpop.xlane.xlu0 %1875
        %1877 = vadd.xlane.f32.xlu0 %v1846
        %v1878 = vpop.xlane.xlu0 %1877
        %1879 = vadd.xlane.f32.xlu0 %v1848
        %v1880 = vpop.xlane.xlu0 %1879
        %v1881 = vrcp.pop %v1850
        %v1882 = vrcp.pop %v1852
        %v1883 = vrcp.pop %v1854
        %v1884 = vrcp.pop %v1856
        %v1885 = vrcp.pop %v1858
        %v1886 = vrcp.pop %v1860
        %v1887 = vrcp.pop %v1862
        %v1888 = vrcp.pop %v1864
        %v1889 = vrcp.pop %v1866
        %v1890 = vrcp.pop %v1868
        %v1891 = vrcp.pop %v1870
        %v1892 = vrcp.pop %v1872
        %v1893 = vrcp.pop %v1874
        %v1894 = vrcp.pop %v1876
        %v1895 = vrcp.pop %v1878
        %v1896 = vrcp.pop %v1880
        %v1897 = vmul.f32 %v1818, %v547
        %v1898 = vmul.f32 %v1820, %v548
        %v1899 = vmul.f32 %v1822, %v549
        %v1900 = vmul.f32 %v1824, %v550
        %v1901 = vmul.f32 %v1826, %v551
        %v1902 = vmul.f32 %v1828, %v552
        %v1903 = vmul.f32 %v1830, %v553
        %v1904 = vmul.f32 %v1832, %v554
        %v1905 = vmul.f32 %v1834, %v555
        %v1906 = vmul.f32 %v1836, %v556
        %v1907 = vmul.f32 %v1838, %v557
        %v1908 = vmul.f32 %v1840, %v558
        %v1909 = vmul.f32 %v1842, %v559
        %v1910 = vmul.f32 %v1844, %v560
        %v1911 = vmul.f32 %v1846, %v561
        %v1912 = vmul.f32 %v1848, %v562
        %v1913 = vpack.c.bf16 %v1898, %v1897
        %v1914 = vpack.c.bf16 %v1900, %v1899
        %v1915 = vpack.c.bf16 %v1902, %v1901
        %v1916 = vpack.c.bf16 %v1904, %v1903
        %v1917 = vpack.c.bf16 %v1906, %v1905
        %v1918 = vpack.c.bf16 %v1908, %v1907
        %v1919 = vpack.c.bf16 %v1910, %v1909
        %v1920 = vpack.c.bf16 %v1912, %v1911
        %vm1921 = vcmp.ge.s32.totalorder %v1155, 16
        %vm1922 = vcmp.lt.s32.totalorder %v1155, 32
        %vm1923 = vmand %vm1921, %vm1922
        %v1924 = vsel %vm1923, 1, 0
        %vm1925 = vcmp.eq.s32.totalorder %v1924, 1
        %vm1926 = vmpackc.low %vm1925, %vm1925
        %v1927 = vsel %vm1926, 65537, 0
        %v1928 = vlaneseq
        %v1929 = vshrl.u32 %v1928, 7
        %v1930 = vsub.s32 0, %v1929
        %v1931 = vrot.slane %v1927, %v1930
        %vm1932 = vcmp.ne.s16.totalorder %v1931, 0
        %v1933 = vsel %vm1932, %v1146, 0
        %v1934 = vsel %vm1932, %v1147, 0
        %v1935 = vsel %vm1932, %v1148, 0
        %v1936 = vsel %vm1932, %v1149, 0
        %v1937 = vsel %vm1932, %v1150, 0
        %v1938 = vsel %vm1932, %v1151, 0
        %v1939 = vsel %vm1932, %v1152, 0
        %v1940 = vsel %vm1932, %v1153, 0
        %1941 = vmatprep.subr.bf16.mxu0 0
        %1942 = vmatpush1.bf16.msra.mxu0 %v1933
        %1943 = vmatprep.subr.bf16.mxu0 0
        %1944 = vmatpush1.bf16.msra.mxu0 %v1934
        %1945 = vmatprep.subr.bf16.mxu0 0
        %1946 = vmatpush1.bf16.msra.mxu0 %v1935
        %1947 = vmatprep.subr.bf16.mxu0 0
        %1948 = vmatpush1.bf16.msra.mxu0 %v1936
        %1949 = vmatprep.subr.bf16.mxu0 0
        %1950 = vmatpush1.bf16.msra.mxu0 %v1937
        %1951 = vmatprep.subr.bf16.mxu0 0
        %1952 = vmatpush1.bf16.msra.mxu0 %v1938
        %1953 = vmatprep.subr.bf16.mxu0 0
        %1954 = vmatpush1.bf16.msra.mxu0 %v1939
        %1955 = vmatprep.subr.bf16.mxu0 0
        %1956 = vmatpush1.bf16.msra.mxu0 %v1940
        %1957 = vmatprep.subr.bf16.mxu0 0
        %1958 = vmatpush1.bf16.msra.mxu0 0
        %1959 = vmatprep.subr.bf16.mxu0 0
        %1960 = vmatpush1.bf16.msra.mxu0 0
        %1961 = vmatprep.subr.bf16.mxu0 0
        %1962 = vmatpush1.bf16.msra.mxu0 0
        %1963 = vmatprep.subr.bf16.mxu0 0
        %1964 = vmatpush1.bf16.msra.mxu0 0
        %1965 = vmatprep.subr.bf16.mxu0 0
        %1966 = vmatpush1.bf16.msra.mxu0 0
        %1967 = vmatprep.subr.bf16.mxu0 0
        %1968 = vmatpush1.bf16.msra.mxu0 0
        %1969 = vmatprep.subr.bf16.mxu0 0
        %1970 = vmatpush1.bf16.msra.mxu0 0
        %1971 = vmatprep.subr.bf16.mxu0 0
        %1972 = vmatpush1.bf16.msra.mxu0 0
        %1973 = vmatprep.mubr.bf16.mxu0 0
        %1974 = vmatmul.mubr.bf16.gmra.mrb[0].mxu0 %v1913
        %v1975 = vpop.f32.mrb[0].mxu0
        %v1976 = vadd.f32 0.0, %v1975
        %v1977 = vpop.f32.mrb[0].mxu0
        %v1978 = vpop.f32.mrb[0].mxu0
        %v1979 = vadd.f32 0.0, %v1978
        %v1980 = vpop.f32.mrb[0].mxu0
        %1981 = vmatprep.mubr.bf16.mxu0 0
        %1982 = vmatmul.mubr.bf16.gmra.mrb[0].mxu0 %v1914
        %v1983 = vpop.f32.mrb[0].mxu0
        %v1984 = vadd.f32 0.0, %v1983
        %v1985 = vpop.f32.mrb[0].mxu0
        %v1986 = vpop.f32.mrb[0].mxu0
        %v1987 = vadd.f32 0.0, %v1986
        %v1988 = vpop.f32.mrb[0].mxu0
        %1989 = vmatprep.mubr.bf16.mxu0 0
        %1990 = vmatmul.mubr.bf16.gmra.mrb[0].mxu0 %v1915
        %v1991 = vpop.f32.mrb[0].mxu0
        %v1992 = vadd.f32 0.0, %v1991
        %v1993 = vpop.f32.mrb[0].mxu0
        %v1994 = vpop.f32.mrb[0].mxu0
        %v1995 = vadd.f32 0.0, %v1994
        %v1996 = vpop.f32.mrb[0].mxu0
        %1997 = vmatprep.mubr.bf16.mxu0 0
        %1998 = vmatmul.mubr.bf16.gmra.mrb[0].mxu0 %v1916
        %v1999 = vpop.f32.mrb[0].mxu0
        %v2000 = vadd.f32 0.0, %v1999
        %v2001 = vpop.f32.mrb[0].mxu0
        %v2002 = vpop.f32.mrb[0].mxu0
        %v2003 = vadd.f32 0.0, %v2002
        %v2004 = vpop.f32.mrb[0].mxu0
        %2005 = vmatprep.mubr.bf16.mxu0 0
        %2006 = vmatmul.mubr.bf16.gmra.mrb[0].mxu0 %v1917
        %v2007 = vpop.f32.mrb[0].mxu0
        %v2008 = vadd.f32 0.0, %v2007
        %v2009 = vpop.f32.mrb[0].mxu0
        %v2010 = vpop.f32.mrb[0].mxu0
        %v2011 = vadd.f32 0.0, %v2010
        %v2012 = vpop.f32.mrb[0].mxu0
        %2013 = vmatprep.mubr.bf16.mxu0 0
        %2014 = vmatmul.mubr.bf16.gmra.mrb[0].mxu0 %v1918
        %v2015 = vpop.f32.mrb[0].mxu0
        %v2016 = vadd.f32 0.0, %v2015
        %v2017 = vpop.f32.mrb[0].mxu0
        %v2018 = vpop.f32.mrb[0].mxu0
        %v2019 = vadd.f32 0.0, %v2018
        %v2020 = vpop.f32.mrb[0].mxu0
        %2021 = vmatprep.mubr.bf16.mxu0 0
        %2022 = vmatmul.mubr.bf16.gmra.mrb[0].mxu0 %v1919
        %v2023 = vpop.f32.mrb[0].mxu0
        %v2024 = vadd.f32 0.0, %v2023
        %v2025 = vpop.f32.mrb[0].mxu0
        %v2026 = vpop.f32.mrb[0].mxu0
        %v2027 = vadd.f32 0.0, %v2026
        %v2028 = vpop.f32.mrb[0].mxu0
        %2029 = vmatprep.mubr.bf16.mxu0 0
        %2030 = vmatmul.mubr.bf16.gmra.mrb[0].mxu0 %v1920
        %v2031 = vpop.f32.mrb[0].mxu0
        %v2032 = vadd.f32 0.0, %v2031
        %v2033 = vpop.f32.mrb[0].mxu0
        %v2034 = vpop.f32.mrb[0].mxu0
        %v2035 = vadd.f32 0.0, %v2034
        %v2036 = vpop.f32.mrb[0].mxu0
        %2037 = vdwg.mxu0
        %v2038 = vmul.f32 %v1881, %v1976
        %v2039 = vmul.f32 %v1882, %v1979
        %v2040 = vmul.f32 %v1883, %v1984
        %v2041 = vmul.f32 %v1884, %v1987
        %v2042 = vmul.f32 %v1885, %v1992
        %v2043 = vmul.f32 %v1886, %v1995
        %v2044 = vmul.f32 %v1887, %v2000
        %v2045 = vmul.f32 %v1888, %v2003
        %v2046 = vmul.f32 %v1889, %v2008
        %v2047 = vmul.f32 %v1890, %v2011
        %v2048 = vmul.f32 %v1891, %v2016
        %v2049 = vmul.f32 %v1892, %v2019
        %v2050 = vmul.f32 %v1893, %v2024
        %v2051 = vmul.f32 %v1894, %v2027
        %v2052 = vmul.f32 %v1895, %v2032
        %v2053 = vmul.f32 %v1896, %v2035
        %v2054 = vadd.f32 %v1605, %v2038
        %v2055 = vadd.f32 %v1606, %v2039
        %v2056 = vadd.f32 %v1607, %v2040
        %v2057 = vadd.f32 %v1608, %v2041
        %v2058 = vadd.f32 %v1609, %v2042
        %v2059 = vadd.f32 %v1610, %v2043
        %v2060 = vadd.f32 %v1611, %v2044
        %v2061 = vadd.f32 %v1612, %v2045
        %v2062 = vadd.f32 %v1613, %v2046
        %v2063 = vadd.f32 %v1614, %v2047
        %v2064 = vadd.f32 %v1615, %v2048
        %v2065 = vadd.f32 %v1616, %v2049
        %v2066 = vadd.f32 %v1617, %v2050
        %v2067 = vadd.f32 %v1618, %v2051
        %v2068 = vadd.f32 %v1619, %v2052
        %v2069 = vadd.f32 %v1620, %v2053
        %v2071 = vlaneseq
        %v2072 = vshrl.u32 %v2071, 7
        %v2073 = vsub.s32 0, %v2072
        %v2074 = vrot.slane %v565, %v2073
        %v2076 = vadd.f32 %v2054, %v2074
        %v2077 = vadd.f32 %v2055, %v2074
        %v2078 = vadd.f32 %v2056, %v2074
        %v2079 = vadd.f32 %v2057, %v2074
        %v2080 = vadd.f32 %v2058, %v2074
        %v2081 = vadd.f32 %v2059, %v2074
        %v2082 = vadd.f32 %v2060, %v2074
        %v2083 = vadd.f32 %v2061, %v2074
        %v2084 = vadd.f32 %v2062, %v2074
        %v2085 = vadd.f32 %v2063, %v2074
        %v2086 = vadd.f32 %v2064, %v2074
        %v2087 = vadd.f32 %v2065, %v2074
        %v2088 = vadd.f32 %v2066, %v2074
        %v2089 = vadd.f32 %v2067, %v2074
        %v2090 = vadd.f32 %v2068, %v2074
        %v2091 = vadd.f32 %v2069, %v2074
        %v2092 = vld [vmem:[#allocation2] sm:$0xff]
        %v2093 = vld [vmem:[#allocation2 + $0x8] sm:$0xff]
        %v2094 = vld [vmem:[#allocation2 + $0x10] sm:$0xff]
        %v2095 = vld [vmem:[#allocation2 + $0x18] sm:$0xff]
        %v2096 = vld [vmem:[#allocation2 + $0x20] sm:$0xff]
        %v2097 = vld [vmem:[#allocation2 + $0x28] sm:$0xff]
        %v2098 = vld [vmem:[#allocation2 + $0x30] sm:$0xff]
        %v2099 = vld [vmem:[#allocation2 + $0x38] sm:$0xff]
        %v2100 = vld [vmem:[#allocation2 + $0x40] sm:$0xff]
        %v2101 = vld [vmem:[#allocation2 + $0x48] sm:$0xff]
        %v2102 = vld [vmem:[#allocation2 + $0x50] sm:$0xff]
        %v2103 = vld [vmem:[#allocation2 + $0x58] sm:$0xff]
        %v2104 = vld [vmem:[#allocation2 + $0x60] sm:$0xff]
        %v2105 = vld [vmem:[#allocation2 + $0x68] sm:$0xff]
        %v2106 = vld [vmem:[#allocation2 + $0x70] sm:$0xff]
        %v2107 = vld [vmem:[#allocation2 + $0x78] sm:$0xff]
        %2109 = vset.pattern.permute.xlu0 0
        %2110 = vperm.xlu0 %2109, %v566
        %v2111 = vpop.permute.xlu0 %2110
        %2114 = vset.pattern.permute.xlu0 0
        %2115 = vperm.xlu0 %2114, %v567
        %v2116 = vpop.permute.xlu0 %2115
        %2119 = vset.pattern.permute.xlu0 0
        %2120 = vperm.xlu0 %2119, %v568
        %v2121 = vpop.permute.xlu0 %2120
        %2124 = vset.pattern.permute.xlu0 0
        %2125 = vperm.xlu0 %2124, %v569
        %v2126 = vpop.permute.xlu0 %2125
        %2129 = vset.pattern.permute.xlu0 0
        %2130 = vperm.xlu0 %2129, %v570
        %v2131 = vpop.permute.xlu0 %2130
        %2134 = vset.pattern.permute.xlu0 0
        %2135 = vperm.xlu0 %2134, %v571
        %v2136 = vpop.permute.xlu0 %2135
        %2139 = vset.pattern.permute.xlu0 0
        %2140 = vperm.xlu0 %2139, %v572
        %v2141 = vpop.permute.xlu0 %2140
        %2144 = vset.pattern.permute.xlu0 0
        %2145 = vperm.xlu0 %2144, %v573
        %v2146 = vpop.permute.xlu0 %2145
        %2149 = vset.pattern.permute.xlu0 0
        %2150 = vperm.xlu0 %2149, %v574
        %v2151 = vpop.permute.xlu0 %2150
        %2154 = vset.pattern.permute.xlu0 0
        %2155 = vperm.xlu0 %2154, %v575
        %v2156 = vpop.permute.xlu0 %2155
        %2159 = vset.pattern.permute.xlu0 0
        %2160 = vperm.xlu0 %2159, %v576
        %v2161 = vpop.permute.xlu0 %2160
        %2164 = vset.pattern.permute.xlu0 0
        %2165 = vperm.xlu0 %2164, %v577
        %v2166 = vpop.permute.xlu0 %2165
        %2169 = vset.pattern.permute.xlu0 0
        %2170 = vperm.xlu0 %2169, %v578
        %v2171 = vpop.permute.xlu0 %2170
        %2174 = vset.pattern.permute.xlu0 0
        %2175 = vperm.xlu0 %2174, %v579
        %v2176 = vpop.permute.xlu0 %2175
        %2179 = vset.pattern.permute.xlu0 0
        %2180 = vperm.xlu0 %2179, %v580
        %v2181 = vpop.permute.xlu0 %2180
        %2184 = vset.pattern.permute.xlu0 0
        %2185 = vperm.xlu0 %2184, %v581
        %v2186 = vpop.permute.xlu0 %2185
        %v2188 = vmul.f32 %v2111, %v2076
        %v2189 = vmul.f32 %v2116, %v2077
        %v2190 = vmul.f32 %v2121, %v2078
        %v2191 = vmul.f32 %v2126, %v2079
        %v2192 = vmul.f32 %v2131, %v2080
        %v2193 = vmul.f32 %v2136, %v2081
        %v2194 = vmul.f32 %v2141, %v2082
        %v2195 = vmul.f32 %v2146, %v2083
        %v2196 = vmul.f32 %v2151, %v2084
        %v2197 = vmul.f32 %v2156, %v2085
        %v2198 = vmul.f32 %v2161, %v2086
        %v2199 = vmul.f32 %v2166, %v2087
        %v2200 = vmul.f32 %v2171, %v2088
        %v2201 = vmul.f32 %v2176, %v2089
        %v2202 = vmul.f32 %v2181, %v2090
        %v2203 = vmul.f32 %v2186, %v2091
        %v2204 = vadd.f32 %v2092, %v2188
        %v2205 = vadd.f32 %v2093, %v2189
        %v2206 = vadd.f32 %v2094, %v2190
        %v2207 = vadd.f32 %v2095, %v2191
        %v2208 = vadd.f32 %v2096, %v2192
        %v2209 = vadd.f32 %v2097, %v2193
        %v2210 = vadd.f32 %v2098, %v2194
        %v2211 = vadd.f32 %v2099, %v2195
        %v2212 = vadd.f32 %v2100, %v2196
        %v2213 = vadd.f32 %v2101, %v2197
        %v2214 = vadd.f32 %v2102, %v2198
        %v2215 = vadd.f32 %v2103, %v2199
        %v2216 = vadd.f32 %v2104, %v2200
        %v2217 = vadd.f32 %v2105, %v2201
        %v2218 = vadd.f32 %v2106, %v2202
        %v2219 = vadd.f32 %v2107, %v2203
        %2220 = vst.msk [vmem:[#allocation2] sm:$0xff] %vm592, %v2204
        %2221 = vst.msk [vmem:[#allocation2 + $0x8] sm:$0xff] %vm592, %v2205
        %2222 = vst.msk [vmem:[#allocation2 + $0x10] sm:$0xff] %vm592, %v2206
        %2223 = vst.msk [vmem:[#allocation2 + $0x18] sm:$0xff] %vm592, %v2207
        %2224 = vst.msk [vmem:[#allocation2 + $0x20] sm:$0xff] %vm592, %v2208
        %2225 = vst.msk [vmem:[#allocation2 + $0x28] sm:$0xff] %vm592, %v2209
        %2226 = vst.msk [vmem:[#allocation2 + $0x30] sm:$0xff] %vm592, %v2210
        %2227 = vst.msk [vmem:[#allocation2 + $0x38] sm:$0xff] %vm592, %v2211
        %2228 = vst.msk [vmem:[#allocation2 + $0x40] sm:$0xff] %vm592, %v2212
        %2229 = vst.msk [vmem:[#allocation2 + $0x48] sm:$0xff] %vm592, %v2213
        %2230 = vst.msk [vmem:[#allocation2 + $0x50] sm:$0xff] %vm592, %v2214
        %2231 = vst.msk [vmem:[#allocation2 + $0x58] sm:$0xff] %vm592, %v2215
        %2232 = vst.msk [vmem:[#allocation2 + $0x60] sm:$0xff] %vm592, %v2216
        %2233 = vst.msk [vmem:[#allocation2 + $0x68] sm:$0xff] %vm592, %v2217
        %2234 = vst.msk [vmem:[#allocation2 + $0x70] sm:$0xff] %vm592, %v2218
        %2235 = vst.msk [vmem:[#allocation2 + $0x78] sm:$0xff] %vm592, %v2219
        %p2236 = scmp.eq.s32.totalorder %s24, 1
        // Predicated region
        $region65: #{tpu_custom_call.1} parent=59 // pred_check
          %p2237 = pneg %p2236
        $region66: #{tpu_custom_call.1} parent=59 // pred_check_branch
          %2239 = sbr.rel (%p2237) target = $region68
        $region67: #{tpu_custom_call.1} parent=59 // pred_region
          %v2240 = vld [vmem:[#allocation2] sm:$0xff]
          %v2241 = vld [vmem:[#allocation2 + $0x8] sm:$0xff]
          %v2242 = vld [vmem:[#allocation2 + $0x10] sm:$0xff]
          %v2243 = vld [vmem:[#allocation2 + $0x18] sm:$0xff]
          %v2244 = vld [vmem:[#allocation2 + $0x20] sm:$0xff]
          %v2245 = vld [vmem:[#allocation2 + $0x28] sm:$0xff]
          %v2246 = vld [vmem:[#allocation2 + $0x30] sm:$0xff]
          %v2247 = vld [vmem:[#allocation2 + $0x38] sm:$0xff]
          %v2248 = vld [vmem:[#allocation2 + $0x40] sm:$0xff]
          %v2249 = vld [vmem:[#allocation2 + $0x48] sm:$0xff]
          %v2250 = vld [vmem:[#allocation2 + $0x50] sm:$0xff]
          %v2251 = vld [vmem:[#allocation2 + $0x58] sm:$0xff]
          %v2252 = vld [vmem:[#allocation2 + $0x60] sm:$0xff]
          %v2253 = vld [vmem:[#allocation2 + $0x68] sm:$0xff]
          %v2254 = vld [vmem:[#allocation2 + $0x70] sm:$0xff]
          %v2255 = vld [vmem:[#allocation2 + $0x78] sm:$0xff]
          %v2256 = vld [vmem:[%s8] sm:$0xff]
          %v2257 = vld [vmem:[%s8 + $0x8] sm:$0xff]
          %v2258 = vld [vmem:[%s8 + $0x10] sm:$0xff]
          %v2259 = vld [vmem:[%s8 + $0x18] sm:$0xff]
          %v2260 = vld [vmem:[%s9] sm:$0x1]
          %v2262 = vlaneseq
          %v2263 = vshrl.u32 %v2262, 7
          %v2264 = vsub.s32 0, %v2263
          %v2265 = vrot.slane %v2260, %v2264
          %v2268 = vsel %vm592, %v2240, 0
          %v2271 = vsel %vm592, %v2241, 0
          %v2274 = vsel %vm592, %v2242, 0
          %v2277 = vsel %vm592, %v2243, 0
          %v2280 = vsel %vm592, %v2244, 0
          %v2283 = vsel %vm592, %v2245, 0
          %v2286 = vsel %vm592, %v2246, 0
          %v2289 = vsel %vm592, %v2247, 0
          %v2292 = vsel %vm592, %v2248, 0
          %v2295 = vsel %vm592, %v2249, 0
          %v2298 = vsel %vm592, %v2250, 0
          %v2301 = vsel %vm592, %v2251, 0
          %v2304 = vsel %vm592, %v2252, 0
          %v2307 = vsel %vm592, %v2253, 0
          %v2310 = vsel %vm592, %v2254, 0
          %v2313 = vsel %vm592, %v2255, 0
          %2315 = vmatprep.subr.mxu0 0.0
          %2316 = vmatpush1.msra.mxu0 %v2256
          %2317 = vmatprep.subr.mxu0 0.0
          %2318 = vmatpush1.msra.mxu0 %v2257
          %2319 = vmatprep.subr.mxu0 0.0
          %2320 = vmatpush1.msra.mxu0 %v2258
          %2321 = vmatprep.subr.mxu0 0.0
          %2322 = vmatpush1.msra.mxu0 %v2259
          %2323 = vmatprep.subr.mxu0 0.0
          %2324 = vmatpush1.msra.mxu0 0.0
          %2325 = vmatprep.subr.mxu0 0.0
          %2326 = vmatpush1.msra.mxu0 0.0
          %2327 = vmatprep.subr.mxu0 0.0
          %2328 = vmatpush1.msra.mxu0 0.0
          %2329 = vmatprep.subr.mxu0 0.0
          %2330 = vmatpush1.msra.mxu0 0.0
          %2331 = vmatprep.subr.mxu0 0.0
          %2332 = vmatpush1.msra.mxu0 0.0
          %2333 = vmatprep.subr.mxu0 0.0
          %2334 = vmatpush1.msra.mxu0 0.0
          %2335 = vmatprep.subr.mxu0 0.0
          %2336 = vmatpush1.msra.mxu0 0.0
          %2337 = vmatprep.subr.mxu0 0.0
          %2338 = vmatpush1.msra.mxu0 0.0
          %2339 = vmatprep.subr.mxu0 0.0
          %2340 = vmatpush1.msra.mxu0 0.0
          %2341 = vmatprep.subr.mxu0 0.0
          %2342 = vmatpush1.msra.mxu0 0.0
          %2343 = vmatprep.subr.mxu0 0.0
          %2344 = vmatpush1.msra.mxu0 0.0
          %2345 = vmatprep.subr.mxu0 0.0
          %2346 = vmatpush1.msra.mxu0 0.0
          %2347 = vmatprep.subr.mxu0 0.0
          %2348 = vmatpush1.msra.mxu0 0.0
          %2349 = vmatprep.subr.mxu0 0.0
          %2350 = vmatpush1.msra.mxu0 0.0
          %2351 = vmatprep.subr.mxu0 0.0
          %2352 = vmatpush1.msra.mxu0 0.0
          %2353 = vmatprep.subr.mxu0 0.0
          %2354 = vmatpush1.msra.mxu0 0.0
          %2355 = vmatprep.subr.mxu0 0.0
          %2356 = vmatpush1.msra.mxu0 0.0
          %2357 = vmatprep.subr.mxu0 0.0
          %2358 = vmatpush1.msra.mxu0 0.0
          %2359 = vmatprep.subr.mxu0 0.0
          %2360 = vmatpush1.msra.mxu0 0.0
          %2361 = vmatprep.subr.mxu0 0.0
          %2362 = vmatpush1.msra.mxu0 0.0
          %2363 = vmatprep.subr.mxu0 0.0
          %2364 = vmatpush1.msra.mxu0 0.0
          %2365 = vmatprep.subr.mxu0 0.0
          %2366 = vmatpush1.msra.mxu0 0.0
          %2367 = vmatprep.subr.mxu0 0.0
          %2368 = vmatpush1.msra.mxu0 0.0
          %2369 = vmatprep.subr.mxu0 0.0
          %2370 = vmatpush1.msra.mxu0 0.0
          %2371 = vmatprep.subr.mxu0 0.0
          %2372 = vmatpush1.msra.mxu0 0.0
          %2373 = vmatprep.subr.mxu0 0.0
          %2374 = vmatpush1.msra.mxu0 0.0
          %2375 = vmatprep.subr.mxu0 0.0
          %2376 = vmatpush1.msra.mxu0 0.0
          %2377 = vmatprep.subr.mxu0 0.0
          %2378 = vmatpush1.msra.mxu0 0.0
          %2379 = vmatprep.mubr.f32.mxu0 0.0
          %2380 = vmatmul.mubr.f32.gmra.mrb[0].mxu0 %v2268
          %v2381 = vpop.f32.mrb[0].mxu0
          %v2382 = vadd.f32 %v2265, %v2381
          %v2383 = vpop.f32.mrb[0].mxu0
          %2384 = vmatprep.mubr.f32.mxu0 0.0
          %2385 = vmatmul.mubr.f32.gmra.mrb[0].mxu0 %v2271
          %v2386 = vpop.f32.mrb[0].mxu0
          %v2387 = vadd.f32 %v2265, %v2386
          %v2388 = vpop.f32.mrb[0].mxu0
          %2389 = vmatprep.mubr.f32.mxu0 0.0
          %2390 = vmatmul.mubr.f32.gmra.mrb[0].mxu0 %v2274
          %v2391 = vpop.f32.mrb[0].mxu0
          %v2392 = vadd.f32 %v2265, %v2391
          %v2393 = vpop.f32.mrb[0].mxu0
          %2394 = vmatprep.mubr.f32.mxu0 0.0
          %2395 = vmatmul.mubr.f32.gmra.mrb[0].mxu0 %v2277
          %v2396 = vpop.f32.mrb[0].mxu0
          %v2397 = vadd.f32 %v2265, %v2396
          %v2398 = vpop.f32.mrb[0].mxu0
          %2399 = vmatprep.mubr.f32.mxu0 0.0
          %2400 = vmatmul.mubr.f32.gmra.mrb[0].mxu0 %v2280
          %v2401 = vpop.f32.mrb[0].mxu0
          %v2402 = vadd.f32 %v2265, %v2401
          %v2403 = vpop.f32.mrb[0].mxu0
          %2404 = vmatprep.mubr.f32.mxu0 0.0
          %2405 = vmatmul.mubr.f32.gmra.mrb[0].mxu0 %v2283
          %v2406 = vpop.f32.mrb[0].mxu0
          %v2407 = vadd.f32 %v2265, %v2406
          %v2408 = vpop.f32.mrb[0].mxu0
          %2409 = vmatprep.mubr.f32.mxu0 0.0
          %2410 = vmatmul.mubr.f32.gmra.mrb[0].mxu0 %v2286
          %v2411 = vpop.f32.mrb[0].mxu0
          %v2412 = vadd.f32 %v2265, %v2411
          %v2413 = vpop.f32.mrb[0].mxu0
          %2414 = vmatprep.mubr.f32.mxu0 0.0
          %2415 = vmatmul.mubr.f32.gmra.mrb[0].mxu0 %v2289
          %v2416 = vpop.f32.mrb[0].mxu0
          %v2417 = vadd.f32 %v2265, %v2416
          %v2418 = vpop.f32.mrb[0].mxu0
          %2419 = vmatprep.mubr.f32.mxu0 0.0
          %2420 = vmatmul.mubr.f32.gmra.mrb[0].mxu0 %v2292
          %v2421 = vpop.f32.mrb[0].mxu0
          %v2422 = vadd.f32 %v2265, %v2421
          %v2423 = vpop.f32.mrb[0].mxu0
          %2424 = vmatprep.mubr.f32.mxu0 0.0
          %2425 = vmatmul.mubr.f32.gmra.mrb[0].mxu0 %v2295
          %v2426 = vpop.f32.mrb[0].mxu0
          %v2427 = vadd.f32 %v2265, %v2426
          %v2428 = vpop.f32.mrb[0].mxu0
          %2429 = vmatprep.mubr.f32.mxu0 0.0
          %2430 = vmatmul.mubr.f32.gmra.mrb[0].mxu0 %v2298
          %v2431 = vpop.f32.mrb[0].mxu0
          %v2432 = vadd.f32 %v2265, %v2431
          %v2433 = vpop.f32.mrb[0].mxu0
          %2434 = vmatprep.mubr.f32.mxu0 0.0
          %2435 = vmatmul.mubr.f32.gmra.mrb[0].mxu0 %v2301
          %v2436 = vpop.f32.mrb[0].mxu0
          %v2437 = vadd.f32 %v2265, %v2436
          %v2438 = vpop.f32.mrb[0].mxu0
          %2439 = vmatprep.mubr.f32.mxu0 0.0
          %2440 = vmatmul.mubr.f32.gmra.mrb[0].mxu0 %v2304
          %v2441 = vpop.f32.mrb[0].mxu0
          %v2442 = vadd.f32 %v2265, %v2441
          %v2443 = vpop.f32.mrb[0].mxu0
          %2444 = vmatprep.mubr.f32.mxu0 0.0
          %2445 = vmatmul.mubr.f32.gmra.mrb[0].mxu0 %v2307
          %v2446 = vpop.f32.mrb[0].mxu0
          %v2447 = vadd.f32 %v2265, %v2446
          %v2448 = vpop.f32.mrb[0].mxu0
          %2449 = vmatprep.mubr.f32.mxu0 0.0
          %2450 = vmatmul.mubr.f32.gmra.mrb[0].mxu0 %v2310
          %v2451 = vpop.f32.mrb[0].mxu0
          %v2452 = vadd.f32 %v2265, %v2451
          %v2453 = vpop.f32.mrb[0].mxu0
          %2454 = vmatprep.mubr.f32.mxu0 0.0
          %2455 = vmatmul.mubr.f32.gmra.mrb[0].mxu0 %v2313
          %v2456 = vpop.f32.mrb[0].mxu0
          %v2457 = vadd.f32 %v2265, %v2456
          %v2458 = vpop.f32.mrb[0].mxu0
          %2459 = vdwg.mxu0
          %vm2460 = vcmask 130048
          %2461 = vst.msk [vmem:[%s11] sm:$0xff] %vm2460, %v2382
          %2462 = vst.msk [vmem:[%s11 + $0x8] sm:$0xff] %vm2460, %v2387
          %2463 = vst.msk [vmem:[%s11 + $0x10] sm:$0xff] %vm2460, %v2392
          %2464 = vst.msk [vmem:[%s11 + $0x18] sm:$0xff] %vm2460, %v2397
          %2465 = vst.msk [vmem:[%s11 + $0x20] sm:$0xff] %vm2460, %v2402
          %2466 = vst.msk [vmem:[%s11 + $0x28] sm:$0xff] %vm2460, %v2407
          %2467 = vst.msk [vmem:[%s11 + $0x30] sm:$0xff] %vm2460, %v2412
          %2468 = vst.msk [vmem:[%s11 + $0x38] sm:$0xff] %vm2460, %v2417
          %2469 = vst.msk [vmem:[%s11 + $0x40] sm:$0xff] %vm2460, %v2422
          %2470 = vst.msk [vmem:[%s11 + $0x48] sm:$0xff] %vm2460, %v2427
          %2471 = vst.msk [vmem:[%s11 + $0x50] sm:$0xff] %vm2460, %v2432
          %2472 = vst.msk [vmem:[%s11 + $0x58] sm:$0xff] %vm2460, %v2437
          %2473 = vst.msk [vmem:[%s11 + $0x60] sm:$0xff] %vm2460, %v2442
          %2474 = vst.msk [vmem:[%s11 + $0x68] sm:$0xff] %vm2460, %v2447
          %2475 = vst.msk [vmem:[%s11 + $0x70] sm:$0xff] %vm2460, %v2452
          %2476 = vst.msk [vmem:[%s11 + $0x78] sm:$0xff] %vm2460, %v2457
          %v2478 = vsel %vm2460, %v2382, 0
          %v2481 = vsel %vm2460, %v2387, 0
          %v2484 = vsel %vm2460, %v2392, 0
          %v2487 = vsel %vm2460, %v2397, 0
          %v2490 = vsel %vm2460, %v2402, 0
          %v2493 = vsel %vm2460, %v2407, 0
          %v2496 = vsel %vm2460, %v2412, 0
          %v2499 = vsel %vm2460, %v2417, 0
          %v2502 = vsel %vm2460, %v2422, 0
          %v2505 = vsel %vm2460, %v2427, 0
          %v2508 = vsel %vm2460, %v2432, 0
          %v2511 = vsel %vm2460, %v2437, 0
          %v2514 = vsel %vm2460, %v2442, 0
          %v2517 = vsel %vm2460, %v2447, 0
          %v2520 = vsel %vm2460, %v2452, 0
          %v2523 = vsel %vm2460, %v2457, 0
          %2525 = vmatprep.subr.mxu0 0.0
          %2526 = vmatpush1.xpose.msra.mxu0 %v2478
          %2527 = vmatprep.subr.mxu0 0.0
          %2528 = vmatpush1.xpose.msra.mxu0 %v2481
          %2529 = vmatprep.subr.mxu0 0.0
          %2530 = vmatpush1.xpose.msra.mxu0 %v2484
          %2531 = vmatprep.subr.mxu0 0.0
          %2532 = vmatpush1.xpose.msra.mxu0 %v2487
          %2533 = vmatprep.subr.mxu0 0.0
          %2534 = vmatpush1.xpose.msra.mxu0 %v2490
          %2535 = vmatprep.subr.mxu0 0.0
          %2536 = vmatpush1.xpose.msra.mxu0 %v2493
          %2537 = vmatprep.subr.mxu0 0.0
          %2538 = vmatpush1.xpose.msra.mxu0 %v2496
          %2539 = vmatprep.subr.mxu0 0.0
          %2540 = vmatpush1.xpose.msra.mxu0 %v2499
          %2541 = vmatprep.subr.mxu0 0.0
          %2542 = vmatpush1.xpose.msra.mxu0 %v2502
          %2543 = vmatprep.subr.mxu0 0.0
          %2544 = vmatpush1.xpose.msra.mxu0 %v2505
          %2545 = vmatprep.subr.mxu0 0.0
          %2546 = vmatpush1.xpose.msra.mxu0 %v2508
          %2547 = vmatprep.subr.mxu0 0.0
          %2548 = vmatpush1.xpose.msra.mxu0 %v2511
          %2549 = vmatprep.subr.mxu0 0.0
          %2550 = vmatpush1.xpose.msra.mxu0 %v2514
          %2551 = vmatprep.subr.mxu0 0.0
          %2552 = vmatpush1.xpose.msra.mxu0 %v2517
          %2553 = vmatprep.subr.mxu0 0.0
          %2554 = vmatpush1.xpose.msra.mxu0 %v2520
          %2555 = vmatprep.subr.mxu0 0.0
          %2556 = vmatpush1.xpose.msra.mxu0 %v2523
          %2557 = vmatprep.subr.mxu0 0.0
          %2558 = vmatpush1.xpose.msra.mxu0 0.0
          %2559 = vmatprep.subr.mxu0 0.0
          %2560 = vmatpush1.xpose.msra.mxu0 0.0
          %2561 = vmatprep.subr.mxu0 0.0
          %2562 = vmatpush1.xpose.msra.mxu0 0.0
          %2563 = vmatprep.subr.mxu0 0.0
          %2564 = vmatpush1.xpose.msra.mxu0 0.0
          %2565 = vmatprep.subr.mxu0 0.0
          %2566 = vmatpush1.xpose.msra.mxu0 0.0
          %2567 = vmatprep.subr.mxu0 0.0
          %2568 = vmatpush1.xpose.msra.mxu0 0.0
          %2569 = vmatprep.subr.mxu0 0.0
          %2570 = vmatpush1.xpose.msra.mxu0 0.0
          %2571 = vmatprep.subr.mxu0 0.0
          %2572 = vmatpush1.xpose.msra.mxu0 0.0
          %2573 = vmatprep.subr.mxu0 0.0
          %2574 = vmatpush1.xpose.msra.mxu0 0.0
          %2575 = vmatprep.subr.mxu0 0.0
          %2576 = vmatpush1.xpose.msra.mxu0 0.0
          %2577 = vmatprep.subr.mxu0 0.0
          %2578 = vmatpush1.xpose.msra.mxu0 0.0
          %2579 = vmatprep.subr.mxu0 0.0
          %2580 = vmatpush1.xpose.msra.mxu0 0.0
          %2581 = vmatprep.subr.mxu0 0.0
          %2582 = vmatpush1.xpose.msra.mxu0 0.0
          %2583 = vmatprep.subr.mxu0 0.0
          %2584 = vmatpush1.xpose.msra.mxu0 0.0
          %2585 = vmatprep.subr.mxu0 0.0
          %2586 = vmatpush1.xpose.msra.mxu0 0.0
          %2587 = vmatprep.subr.mxu0 0.0
          %2588 = vmatpush1.xpose.msra.mxu0 0.0
          %2589 = vmatprep.mubr.f32.mxu0 0.0
          %2590 = vmatmul.mubr.f32.gmra.mrb[0].mxu0 %v2478
          %v2591 = vpop.f32.mrb[0].mxu0
          %v2592 = vadd.f32 0.0, %v2591
          %v2593 = vpop.f32.mrb[0].mxu0
          %2594 = vmatprep.mubr.f32.mxu0 0.0
          %2595 = vmatmul.mubr.f32.gmra.mrb[0].mxu0 %v2481
          %v2596 = vpop.f32.mrb[0].mxu0
          %v2597 = vadd.f32 0.0, %v2596
          %v2598 = vpop.f32.mrb[0].mxu0
          %2599 = vmatprep.mubr.f32.mxu0 0.0
          %2600 = vmatmul.mubr.f32.gmra.mrb[0].mxu0 %v2484
          %v2601 = vpop.f32.mrb[0].mxu0
          %v2602 = vadd.f32 0.0, %v2601
          %v2603 = vpop.f32.mrb[0].mxu0
          %2604 = vmatprep.mubr.f32.mxu0 0.0
          %2605 = vmatmul.mubr.f32.gmra.mrb[0].mxu0 %v2487
          %v2606 = vpop.f32.mrb[0].mxu0
          %v2607 = vadd.f32 0.0, %v2606
          %v2608 = vpop.f32.mrb[0].mxu0
          %2609 = vmatprep.mubr.f32.mxu0 0.0
          %2610 = vmatmul.mubr.f32.gmra.mrb[0].mxu0 %v2490
          %v2611 = vpop.f32.mrb[0].mxu0
          %v2612 = vadd.f32 0.0, %v2611
          %v2613 = vpop.f32.mrb[0].mxu0
          %2614 = vmatprep.mubr.f32.mxu0 0.0
          %2615 = vmatmul.mubr.f32.gmra.mrb[0].mxu0 %v2493
          %v2616 = vpop.f32.mrb[0].mxu0
          %v2617 = vadd.f32 0.0, %v2616
          %v2618 = vpop.f32.mrb[0].mxu0
          %2619 = vmatprep.mubr.f32.mxu0 0.0
          %2620 = vmatmul.mubr.f32.gmra.mrb[0].mxu0 %v2496
          %v2621 = vpop.f32.mrb[0].mxu0
          %v2622 = vadd.f32 0.0, %v2621
          %v2623 = vpop.f32.mrb[0].mxu0
          %2624 = vmatprep.mubr.f32.mxu0 0.0
          %2625 = vmatmul.mubr.f32.gmra.mrb[0].mxu0 %v2499
          %v2626 = vpop.f32.mrb[0].mxu0
          %v2627 = vadd.f32 0.0, %v2626
          %v2628 = vpop.f32.mrb[0].mxu0
          %2629 = vmatprep.mubr.f32.mxu0 0.0
          %2630 = vmatmul.mubr.f32.gmra.mrb[0].mxu0 %v2502
          %v2631 = vpop.f32.mrb[0].mxu0
          %v2632 = vadd.f32 0.0, %v2631
          %v2633 = vpop.f32.mrb[0].mxu0
          %2634 = vmatprep.mubr.f32.mxu0 0.0
          %2635 = vmatmul.mubr.f32.gmra.mrb[0].mxu0 %v2505
          %v2636 = vpop.f32.mrb[0].mxu0
          %v2637 = vadd.f32 0.0, %v2636
          %v2638 = vpop.f32.mrb[0].mxu0
          %2639 = vmatprep.mubr.f32.mxu0 0.0
          %2640 = vmatmul.mubr.f32.gmra.mrb[0].mxu0 %v2508
          %v2641 = vpop.f32.mrb[0].mxu0
          %v2642 = vadd.f32 0.0, %v2641
          %v2643 = vpop.f32.mrb[0].mxu0
          %2644 = vmatprep.mubr.f32.mxu0 0.0
          %2645 = vmatmul.mubr.f32.gmra.mrb[0].mxu0 %v2511
          %v2646 = vpop.f32.mrb[0].mxu0
          %v2647 = vadd.f32 0.0, %v2646
          %v2648 = vpop.f32.mrb[0].mxu0
          %2649 = vmatprep.mubr.f32.mxu0 0.0
          %2650 = vmatmul.mubr.f32.gmra.mrb[0].mxu0 %v2514
          %v2651 = vpop.f32.mrb[0].mxu0
          %v2652 = vadd.f32 0.0, %v2651
          %v2653 = vpop.f32.mrb[0].mxu0
          %2654 = vmatprep.mubr.f32.mxu0 0.0
          %2655 = vmatmul.mubr.f32.gmra.mrb[0].mxu0 %v2517
          %v2656 = vpop.f32.mrb[0].mxu0
          %v2657 = vadd.f32 0.0, %v2656
          %v2658 = vpop.f32.mrb[0].mxu0
          %2659 = vmatprep.mubr.f32.mxu0 0.0
          %2660 = vmatmul.mubr.f32.gmra.mrb[0].mxu0 %v2520
          %v2661 = vpop.f32.mrb[0].mxu0
          %v2662 = vadd.f32 0.0, %v2661
          %v2663 = vpop.f32.mrb[0].mxu0
          %2664 = vmatprep.mubr.f32.mxu0 0.0
          %2665 = vmatmul.mubr.f32.gmra.mrb[0].mxu0 %v2523
          %v2666 = vpop.f32.mrb[0].mxu0
          %v2667 = vadd.f32 0.0, %v2666
          %v2668 = vpop.f32.mrb[0].mxu0
          %2669 = vdwg.mxu0
          %2670 = vst [vmem:[#allocation3] sm:$0xff] %v2592
          %2671 = vst [vmem:[#allocation3 + $0x8] sm:$0xff] %v2597
          %2672 = vst [vmem:[#allocation3 + $0x10] sm:$0xff] %v2602
          %2673 = vst [vmem:[#allocation3 + $0x18] sm:$0xff] %v2607
          %2674 = vst [vmem:[#allocation3 + $0x20] sm:$0xff] %v2612
          %2675 = vst [vmem:[#allocation3 + $0x28] sm:$0xff] %v2617
          %2676 = vst [vmem:[#allocation3 + $0x30] sm:$0xff] %v2622
          %2677 = vst [vmem:[#allocation3 + $0x38] sm:$0xff] %v2627
          %2678 = vst [vmem:[#allocation3 + $0x40] sm:$0xff] %v2632
          %2679 = vst [vmem:[#allocation3 + $0x48] sm:$0xff] %v2637
          %2680 = vst [vmem:[#allocation3 + $0x50] sm:$0xff] %v2642
          %2681 = vst [vmem:[#allocation3 + $0x58] sm:$0xff] %v2647
          %2682 = vst [vmem:[#allocation3 + $0x60] sm:$0xff] %v2652
          %2683 = vst [vmem:[#allocation3 + $0x68] sm:$0xff] %v2657
          %2684 = vst [vmem:[#allocation3 + $0x70] sm:$0xff] %v2662
          %2685 = vst [vmem:[#allocation3 + $0x78] sm:$0xff] %v2667
        $region68: #{tpu_custom_call.1} parent=59 // pred_fallthru
          _
        // Predicated region
        $region69: #{tpu_custom_call.1} parent=59 // pred_check
          %p2686 = pneg %p287
        $region70: #{tpu_custom_call.1} parent=59 // pred_check_branch
          %2688 = sbr.rel (%p2686) target = $region72
        $region71: #{tpu_custom_call.1} parent=59 // pred_region
          %s2690 = ssub.s32 2048, 2048
          %2691 = vsyncadd [#allocation4], %s2690
          %s2692 = sshll.u32 [#allocation3], 4
          %s2693 = int_to_ptr.vmem [resolvable:$true] %s2692
          %2698 = dma.vmem_to_hbm [thread:$0]  %s2693, 2048, %s10, [#allocation4], 128, 128, 8
        $region72: #{tpu_custom_call.1} parent=59 // pred_fallthru
          _
        // Predicated region
        $region73: #{tpu_custom_call.1} parent=59 // pred_check
          %p2699 = pneg %p308
        $region74: #{tpu_custom_call.1} parent=59 // pred_check_branch
          %2701 = sbr.rel (%p2699) target = $region76
        $region75: #{tpu_custom_call.1} parent=59 // pred_region
          _
        $region76: #{tpu_custom_call.1} parent=59 // pred_fallthru
          _
        // Predicated region
        $region77: #{tpu_custom_call.1} parent=59 // pred_check
          %p2702 = pneg %p287
        $region78: #{tpu_custom_call.1} parent=59 // pred_check_branch
          %2704 = sbr.rel (%p2702) target = $region80
        $region79: #{tpu_custom_call.1} parent=59 // pred_region
          %2705 = dma.done [#allocation4], 2048
        $region80: #{tpu_custom_call.1} parent=59 // pred_fallthru
          _
        // Predicated region
        $region81: #{tpu_custom_call.1} parent=59 // pred_check
          %p2706 = pneg %p308
        $region82: #{tpu_custom_call.1} parent=59 // pred_check_branch
          %2708 = sbr.rel (%p2706) target = $region84
        $region83: #{tpu_custom_call.1} parent=59 // pred_region
          _
        $region84: #{tpu_custom_call.1} parent=59 // pred_fallthru
          _
      $region60: #{tpu_custom_call.1} parent=5 // pred_fallthru
        _
      %p2709 = scmp.le.s32.totalorder 2, %s19
      // Predicated region
      $region85: #{tpu_custom_call.1} parent=5 // pred_check
        %p2710 = pneg %p2709
      $region86: #{tpu_custom_call.1} parent=5 // pred_check_branch
        %2712 = sbr.rel (%p2710) target = $region88
      $region87: #{tpu_custom_call.1} parent=5 // pred_region
        %s2713 = ssub.s32 %s19, 2
      $region88: #{tpu_custom_call.1} parent=5 // pred_fallthru
        _
    $region6: #{tpu_custom_call.1} parent=1 // loop_footer
      %s23 = sadd.s32 1, %s19
    $region7: #{tpu_custom_call.1} parent=1 // loop_footer_branch
      %18 = sbr.rel target = $region3
    $region8: #{tpu_custom_call.1} parent=1 // loop_exit
      _
    %2714 = vsyncpa [#allocation4], 1
    %s2715 = scalar_lea.sflag [#allocation4], 1
    %2716 = vsyncpa %s2715, 1

</llo_original>
